<compile_context>
chip_gen: v6e
topology: v6e:2x2x1
jax: 0.10.0
libtpu: 0.0.40
codegen_flags: <defaults>
</compile_context>

<pallas_src>
import functools
import math

import jax
import jax.numpy as jnp
from jax import lax
from jax.experimental import pallas as pl
from jax.experimental.pallas import tpu as pltpu

_EPS = 1e-5
_SUBLANE = 8
_LANE = 128


# ---------------------------------------------------------------------------
# Sizing helpers
# ---------------------------------------------------------------------------
def _round_down(x, m):
    return (x // m) * m


def _round_up(x, m):
    return ((x + m - 1) // m) * m


def _sublane_multiple(dtype):
    # Sub-32-bit dtypes pack along sublanes: 8 rows f32, 16 bf16, 32 int8/fp8.
    return (4 // jnp.dtype(dtype).itemsize) * _SUBLANE


def _per_elem_bytes(dtype):
    # double/triple-buffered in+out blocks (native dtype) + f32 temporaries.
    return 4 * jnp.dtype(dtype).itemsize + 12


def _vmem_limit_and_budget():
    """Scoped-VMEM limit plus the data budget used for block sizing.

    Single safety margin: the per-element footprints already count buffered
    blocks and f32 temporaries, so the budget is simply 0.85 * limit.
    """
    limit = 48 * 1024 * 1024                       # safe default on every gen
    try:
        cap = int(pltpu.get_tpu_info().vmem_capacity_bytes)
        if cap >= 100 * 1024 * 1024:               # v5e / v6e: 128 MiB / core
            limit = cap - 32 * 1024 * 1024
        else:                                      # v7x: 64 MiB per TC
            limit = max(32 * 1024 * 1024, cap - 16 * 1024 * 1024)
    except Exception:
        pass
    return limit, int(0.85 * limit)


def _choose_tile(total, multiple, budget_rows, min_steps=8):
    """Tile size along one axis: a multiple of `multiple` (or the full extent),
    at most `budget_rows`, shrunk so the grid keeps >= min_steps steps when the
    extent allows it.  Returns 0 if even the smallest legal tile does not fit
    (caller falls back to the two-pass path)."""
    if total <= multiple:
        return total if total <= budget_rows else 0
    tile = min(total, _round_down(budget_rows, multiple))
    if tile < multiple:
        return 0
    step_cap = max(multiple, _round_up(pl.cdiv(total, min_steps), multiple))
    return min(tile, step_cap)


def _buffered_spec(block_shape, index_map, depth=3):
    """Input BlockSpec with 3-deep pipelining when the API supports it."""
    try:
        return pl.BlockSpec(block_shape, index_map,
                            pipeline_mode=pl.Buffered(depth))
    except Exception:                               # pragma: no cover
        return pl.BlockSpec(block_shape, index_map)


# ---------------------------------------------------------------------------
# One-pass kernels (full per-channel data resident in one block)
# ---------------------------------------------------------------------------
def _bn2d_onepass_kernel(x_ref, o_ref):
    # x_ref: (N, TILE_C); channels lane-dense, reduce over the sublane axis.
    x = x_ref[...].astype(jnp.float32)
    inv_n = 1.0 / x.shape[0]
    mean = jnp.sum(x, axis=0, keepdims=True) * inv_n
    xc = x - mean
    var = jnp.sum(xc * xc, axis=0, keepdims=True) * inv_n
    o_ref[...] = (xc * lax.rsqrt(var + _EPS)).astype(o_ref.dtype)


def _bn3d_onepass_kernel(x_ref, o_ref):
    # x_ref: (N, TILE_C, L) with L a multiple of 128 (already lane-dense).
    x = x_ref[...].astype(jnp.float32)
    inv_m = 1.0 / (x.shape[0] * x.shape[2])
    mean = jnp.sum(x, axis=(0, 2), keepdims=True) * inv_m
    xc = x - mean
    var = jnp.sum(xc * xc, axis=(0, 2), keepdims=True) * inv_m
    o_ref[...] = (xc * lax.rsqrt(var + _EPS)).astype(o_ref.dtype)


def _bn3d_folded_kernel(x_ref, gt_ref, o_ref, *, l, c_total, tile_g, needs_mask):
    # x_ref: (N, W) with W = TILE_G * L; channel g occupies lanes [g*L,(g+1)*L).
    # gt_ref: (TILE_G, W) block-diagonal 0/1 grouping matrix (fetched once).
    x = x_ref[...].astype(jnp.float32)
    n, w = x.shape
    inv_m = 1.0 / (n * l)
    if needs_mask:
        # Zero lanes of channels past C so garbage cannot leak through 0*inf
        # in the grouping matmul (only the trailing partial channel tile).
        lane_chan = lax.broadcasted_iota(jnp.int32, (1, w), 1) // l
        ok = (pl.program_id(0) * tile_g + lane_chan) < c_total
        x = jnp.where(ok, x, 0.0)
    gt = gt_ref[...]

    def group(v):                                  # (1, W) -> (1, TILE_G)
        return lax.dot_general(v, gt, (((1,), (1,)), ((), ())),
                               precision=lax.Precision.HIGHEST,
                               preferred_element_type=jnp.float32)

    def spread(v):                                 # (1, TILE_G) -> (1, W)
        return lax.dot_general(v, gt, (((1,), (0,)), ((), ())),
                               precision=lax.Precision.HIGHEST,
                               preferred_element_type=jnp.float32)

    colsum = jnp.sum(x, axis=0, keepdims=True)     # (1, W) sublane reduce
    mean = spread(group(colsum) * inv_m)           # per-channel mean on lanes
    xc = x - mean
    var_ch = group(jnp.sum(xc * xc, axis=0, keepdims=True)) * inv_m
    rstd = spread(lax.rsqrt(var_ch + _EPS))
    o_ref[...] = (xc * rstd).astype(o_ref.dtype)


# ---------------------------------------------------------------------------
# Two-pass kernels (fallback when one channel's data does not fit in a block)
# ---------------------------------------------------------------------------
def _bn3d_stats_kernel(x_ref, mean_ref, rstd_ref, sum_sc, sq_sc, *,
                       inv_m, n_total, tile_n):
    ni = pl.program_id(1)

    @pl.when(ni == 0)
    def _():
        sum_sc[...] = jnp.zeros_like(sum_sc)
        sq_sc[...] = jnp.zeros_like(sq_sc)

    # Dynamic trip count handles the partial trailing N chunk without masks.
    valid = jnp.minimum(tile_n, n_total - ni * tile_n)
    zero = jnp.zeros((x_ref.shape[1], 1), jnp.float32)

    def body(i, carry):
        s, q = carry
        xs = x_ref[i].astype(jnp.float32)          # (TILE_C, L)
        return (s + jnp.sum(xs, axis=1, keepdims=True),
                q + jnp.sum(xs * xs, axis=1, keepdims=True))

    s, q = lax.fori_loop(0, valid, body, (zero, zero))
    sum_sc[...] += s
    sq_sc[...] += q

    @pl.when(ni == pl.num_programs(1) - 1)
    def _():
        mean = sum_sc[...] * inv_m
        var = jnp.maximum(sq_sc[...] * inv_m - mean * mean, 0.0)
        mean_ref[...] = mean
        rstd_ref[...] = lax.rsqrt(var + _EPS)


def _bn3d_apply_kernel(x_ref, mean_ref, rstd_ref, o_ref):
    x = x_ref[...].astype(jnp.float32)             # (TILE_N, TILE_C, L)
    mean = mean_ref[...][None]                     # (1, TILE_C, 1)
    rstd = rstd_ref[...][None]
    o_ref[...] = ((x - mean) * rstd).astype(o_ref.dtype)


def _bn2d_stats_kernel(x_ref, mean_ref, rstd_ref, sum_sc, sq_sc, *,
                       inv_n, n_total, tile_n, needs_mask):
    ni = pl.program_id(1)

    @pl.when(ni == 0)
    def _():
        sum_sc[...] = jnp.zeros_like(sum_sc)
        sq_sc[...] = jnp.zeros_like(sq_sc)

    x = x_ref[...].astype(jnp.float32)             # (TILE_N, TILE_C)
    if needs_mask:
        rows = ni * tile_n + lax.broadcasted_iota(jnp.int32, x.shape, 0)
        x = jnp.where(rows < n_total, x, 0.0)
    sum_sc[...] += jnp.sum(x, axis=0, keepdims=True)
    sq_sc[...] += jnp.sum(x * x, axis=0, keepdims=True)

    @pl.when(ni == pl.num_programs(1) - 1)
    def _():
        mean = sum_sc[...] * inv_n
        var = jnp.maximum(sq_sc[...] * inv_n - mean * mean, 0.0)
        mean_ref[...] = mean
        rstd_ref[...] = lax.rsqrt(var + _EPS)


def _bn2d_apply_kernel(x_ref, mean_ref, rstd_ref, o_ref):
    x = x_ref[...].astype(jnp.float32)             # (TILE_N, TILE_C)
    o_ref[...] = ((x - mean_ref[...]) * rstd_ref[...]).astype(o_ref.dtype)


# ---------------------------------------------------------------------------
# pallas_call wrappers
# ---------------------------------------------------------------------------
def _bn3d_folded_one_pass(x, tile_g, vmem_limit):
    n, c, l = x.shape
    w = tile_g * l
    xf = x.reshape(n, c * l)                       # contiguous -> free reshape
    lane_chan = jnp.arange(w, dtype=jnp.int32) // l
    gt = (jnp.arange(tile_g, dtype=jnp.int32)[:, None]
          == lane_chan[None, :]).astype(jnp.float32)
    g_tiles = pl.cdiv(c, tile_g)
    needs_mask = (c % tile_g) != 0
    out = pl.pallas_call(
        functools.partial(_bn3d_folded_kernel, l=l, c_total=c, tile_g=tile_g,
                          needs_mask=needs_mask),
        out_shape=jax.ShapeDtypeStruct((n, c * l), x.dtype),
        grid=(g_tiles,),
        in_specs=[pl.BlockSpec((n, w), lambda gi: (0, gi)),
                  pl.BlockSpec((tile_g, w), lambda gi: (0, 0))],
        out_specs=pl.BlockSpec((n, w), lambda gi: (0, gi)),
        compiler_params=pltpu.CompilerParams(
            dimension_semantics=("parallel",), vmem_limit_bytes=vmem_limit),
        cost_estimate=pl.CostEstimate(
            flops=8 * x.size, transcendentals=c,
            bytes_accessed=2 * x.size * x.dtype.itemsize + tile_g * w * 4),
    )(xf, gt)
    return out.reshape(n, c, l)


def _bn3d_two_pass(x, vmem_limit, budget):
    n, c, l = x.shape
    itemsize = x.dtype.itemsize
    sub_m = _sublane_multiple(x.dtype)
    per_elem = _per_elem_bytes(x.dtype)
    l_pad = _round_up(l, _LANE)                    # VMEM lane padding for small L
    if c <= sub_m:
        tile_c = c
    else:
        want = max(sub_m, _round_up(pl.cdiv(c, 8), sub_m))   # >=8 channel blocks
        fit = _round_down(budget // (l_pad * per_elem), sub_m)
        tile_c = min(c, want, fit) if fit >= sub_m else min(c, sub_m)
    # TODO(synk): tile L as well if a single (tile_c, L) slab exceeds VMEM.
    tile_n = max(1, min(n, budget // (tile_c * l_pad * per_elem)))
    c_tiles = pl.cdiv(c, tile_c)
    n_tiles = pl.cdiv(n, tile_n)

    mean, rstd = pl.pallas_call(
        functools.partial(_bn3d_stats_kernel, inv_m=1.0 / (n * l),
                          n_total=n, tile_n=tile_n),
        out_shape=(jax.ShapeDtypeStruct((c, 1), jnp.float32),
                   jax.ShapeDtypeStruct((c, 1), jnp.float32)),
        grid=(c_tiles, n_tiles),
        in_specs=[_buffered_spec((tile_n, tile_c, l),
                                 lambda ci, ni: (ni, ci, 0))],
        out_specs=(pl.BlockSpec((tile_c, 1), lambda ci, ni: (ci, 0)),
                   pl.BlockSpec((tile_c, 1), lambda ci, ni: (ci, 0))),
        scratch_shapes=[pltpu.VMEM((tile_c, 1), jnp.float32),
                        pltpu.VMEM((tile_c, 1), jnp.float32)],
        compiler_params=pltpu.CompilerParams(
            dimension_semantics=("parallel", "arbitrary"),
            vmem_limit_bytes=vmem_limit),
        cost_estimate=pl.CostEstimate(
            flops=3 * x.size, transcendentals=c,
            bytes_accessed=x.size * itemsize + 2 * c * 4),
    )(x)

    return pl.pallas_call(
        _bn3d_apply_kernel,
        out_shape=jax.ShapeDtypeStruct(x.shape, x.dtype),
        grid=(c_tiles, n_tiles),
        in_specs=[pl.BlockSpec((tile_n, tile_c, l), lambda ci, ni: (ni, ci, 0)),
                  pl.BlockSpec((tile_c, 1), lambda ci, ni: (ci, 0)),
                  pl.BlockSpec((tile_c, 1), lambda ci, ni: (ci, 0))],
        out_specs=pl.BlockSpec((tile_n, tile_c, l), lambda ci, ni: (ni, ci, 0)),
        compiler_params=pltpu.CompilerParams(
            dimension_semantics=("parallel", "parallel"),
            vmem_limit_bytes=vmem_limit),
        cost_estimate=pl.CostEstimate(
            flops=2 * x.size, transcendentals=0,
            bytes_accessed=2 * x.size * itemsize + 2 * c * 4),
    )(x, mean, rstd)


def _bn2d_two_pass(x, vmem_limit, budget):
    n, c = x.shape
    itemsize = x.dtype.itemsize
    sub_m = _sublane_multiple(x.dtype)
    per_elem = _per_elem_bytes(x.dtype)
    # Adaptive lane-dense channel tile: full C when modest, else wide chunks.
    tile_c = c if c <= 2048 else 2048
    cand_n = _round_down(budget // (tile_c * per_elem), sub_m)
    if cand_n < sub_m and c > _LANE:
        tile_c = min(c, max(_LANE,
                            _round_down(budget // (sub_m * per_elem), _LANE)))
        cand_n = _round_down(budget // (tile_c * per_elem), sub_m)
    tile_n = n if (n <= sub_m or cand_n >= n) else max(sub_m, cand_n)
    c_tiles = pl.cdiv(c, tile_c)
    n_tiles = pl.cdiv(n, tile_n)
    needs_mask = (n % tile_n) != 0

    mean, rstd = pl.pallas_call(
        functools.partial(_bn2d_stats_kernel, inv_n=1.0 / n, n_total=n,
                          tile_n=tile_n, needs_mask=needs_mask),
        out_shape=(jax.ShapeDtypeStruct((1, c), jnp.float32),
                   jax.ShapeDtypeStruct((1, c), jnp.float32)),
        grid=(c_tiles, n_tiles),
        in_specs=[_buffered_spec((tile_n, tile_c), lambda ci, ni: (ni, ci))],
        out_specs=(pl.BlockSpec((1, tile_c), lambda ci, ni: (0, ci)),
                   pl.BlockSpec((1, tile_c), lambda ci, ni: (0, ci))),
        scratch_shapes=[pltpu.VMEM((1, tile_c), jnp.float32),
                        pltpu.VMEM((1, tile_c), jnp.float32)],
        compiler_params=pltpu.CompilerParams(
            dimension_semantics=("parallel", "arbitrary"),
            vmem_limit_bytes=vmem_limit),
        cost_estimate=pl.CostEstimate(
            flops=3 * x.size, transcendentals=c,
            bytes_accessed=x.size * itemsize + 2 * c * 4),
    )(x)

    return pl.pallas_call(
        _bn2d_apply_kernel,
        out_shape=jax.ShapeDtypeStruct(x.shape, x.dtype),
        grid=(c_tiles, n_tiles),
        in_specs=[pl.BlockSpec((tile_n, tile_c), lambda ci, ni: (ni, ci)),
                  pl.BlockSpec((1, tile_c), lambda ci, ni: (0, ci)),
                  pl.BlockSpec((1, tile_c), lambda ci, ni: (0, ci))],
        out_specs=pl.BlockSpec((tile_n, tile_c), lambda ci, ni: (ni, ci)),
        compiler_params=pltpu.CompilerParams(
            dimension_semantics=("parallel", "parallel"),
            vmem_limit_bytes=vmem_limit),
        cost_estimate=pl.CostEstimate(
            flops=2 * x.size, transcendentals=0,
            bytes_accessed=2 * x.size * itemsize + 2 * c * 4),
    )(x, mean, rstd)


def _bn3d_forward(x, vmem_limit, budget):
    n, c, l = x.shape
    per_elem = _per_elem_bytes(x.dtype)
    per_chan = n * l * per_elem                    # one channel's full N*L slab
    sub_m = _sublane_multiple(x.dtype)
    if l % _LANE == 0:
        # Lane axis already dense: keep native (N, C, L) blocks.
        tile_c = _choose_tile(c, sub_m, budget // per_chan)
        if tile_c:
            return pl.pallas_call(
                _bn3d_onepass_kernel,
                out_shape=jax.ShapeDtypeStruct(x.shape, x.dtype),
                grid=(pl.cdiv(c, tile_c),),
                in_specs=[pl.BlockSpec((n, tile_c, l), lambda ci: (0, ci, 0))],
                out_specs=pl.BlockSpec((n, tile_c, l), lambda ci: (0, ci, 0)),
                compiler_params=pltpu.CompilerParams(
                    dimension_semantics=("parallel",),
                    vmem_limit_bytes=vmem_limit),
                cost_estimate=pl.CostEstimate(
                    flops=7 * x.size, transcendentals=c,
                    bytes_accessed=2 * x.size * x.dtype.itemsize),
            )(x)
    else:
        # Fold L into the lane axis: (N, C, L) -> (N, C*L), whole channels per
        # 128-lane-aligned block (lane-dense loads/stores); grouping on MXU.
        q = _LANE // math.gcd(l, _LANE)            # channels per aligned group
        g_cap = max(q, _round_down(int(math.isqrt(max(1, budget // (32 * l)))),
                                   q))             # keep the grouping matrix small
        tile_g = _choose_tile(c, q, min(budget // per_chan, g_cap))
        if tile_g:
            return _bn3d_folded_one_pass(x, tile_g, vmem_limit)
    return _bn3d_two_pass(x, vmem_limit, budget)


def _bn2d_forward(x, vmem_limit, budget):
    n, c = x.shape
    per_elem = _per_elem_bytes(x.dtype)
    tile_c = _choose_tile(c, _LANE, budget // (n * per_elem))
    if tile_c == 0:
        return _bn2d_two_pass(x, vmem_limit, budget)
    return pl.pallas_call(
        _bn2d_onepass_kernel,
        out_shape=jax.ShapeDtypeStruct(x.shape, x.dtype),
        grid=(pl.cdiv(c, tile_c),),
        in_specs=[pl.BlockSpec((n, tile_c), lambda ci: (0, ci))],
        out_specs=pl.BlockSpec((n, tile_c), lambda ci: (0, ci)),
        compiler_params=pltpu.CompilerParams(
            dimension_semantics=("parallel",), vmem_limit_bytes=vmem_limit),
        cost_estimate=pl.CostEstimate(
            flops=7 * x.size, transcendentals=c,
            bytes_accessed=2 * x.size * x.dtype.itemsize),
    )(x)


# ---------------------------------------------------------------------------
# Module wrapper
# ---------------------------------------------------------------------------
class DynamicBatchNorm:
    """JAX/Pallas port of the lazy DynamicBatchNorm module.

    Matches nn.BatchNorm1d training-mode forward output with freshly
    initialized parameters (gamma=1, beta=0 -> folded away), biased batch
    variance, eps=1e-5, and the batch-size-1 identity shortcut.
    """

    def __init__(self):
        self.num_features = None                   # bound lazily, like torch

    def __call__(self, x):
        if self.num_features is None:
            self.num_features = x.shape[1]         # lazy "layer creation"
        if x.shape[0] == 1:                        # identity path
            return x
        if x.shape[1] != self.num_features:
            raise ValueError(
                f"expected {self.num_features} channels, got {x.shape[1]}")
        vmem_limit, budget = _vmem_limit_and_budget()
        if x.ndim == 2:                            # (N, C)
            return _bn2d_forward(x, vmem_limit, budget)
        if x.ndim == 3:                            # (N, C, L)
            return _bn3d_forward(x, vmem_limit, budget)
        raise ValueError("BatchNorm1d expects 2D (N,C) or 3D (N,C,L) input")


def _reference(x, eps=_EPS):
    # Pure-JAX reference: BatchNorm1d training-mode forward, gamma=1, beta=0.
    axes = (0,) if x.ndim == 2 else (0, 2)
    mean = jnp.mean(x, axis=axes, keepdims=True)
    var = jnp.mean((x - mean) ** 2, axis=axes, keepdims=True)
    return (x - mean) / jnp.sqrt(var + eps)


if __name__ == "__main__":
    key = jax.random.PRNGKey(0)
    k1, k2, k3, k4, k5, k6 = jax.random.split(key, 6)

    def check(y, x, tol):
        err = jnp.max(jnp.abs(y.astype(jnp.float32)
                              - _reference(x.astype(jnp.float32))))
        assert float(err) < tol, float(err)

    # (N, C, L) with L=16: lane-folded one-pass kernel (MXU channel grouping).
    m1 = DynamicBatchNorm()
    x3 = jax.random.normal(k1, (4, 8, 16), dtype=jnp.float32)
    y3 = jax.block_until_ready(m1(x3))
    assert y3.shape == x3.shape and y3.dtype == x3.dtype
    check(y3, x3, 2e-2)

    # (N, C) on the same lazily bound layer: lane-dense one-pass kernel.
    x2 = jax.random.normal(k2, (4, 8), dtype=jnp.float32)
    y2 = jax.block_until_ready(m1(x2))
    check(y2, x2, 1e-4)

    # batch-size-1 identity shortcut.
    x1 = x3[:1]
    y1 = jax.block_until_ready(m1(x1))
    assert jnp.array_equal(y1, x1)

    # Partial trailing channel tile in the folded path (C=12 -> tiles of 8).
    xp = jax.random.normal(k3, (8, 12, 16), dtype=jnp.float32)
    yp = jax.block_until_ready(DynamicBatchNorm()(xp))
    check(yp, xp, 2e-2)

    # L already a multiple of 128: native-layout one-pass kernel.
    xw = jax.random.normal(k4, (4, 8, 128), dtype=jnp.float32)
    yw = jax.block_until_ready(DynamicBatchNorm()(xw))
    check(yw, xw, 1e-4)

    # bf16 input through the folded path (output quantized to bf16).
    xb = jax.random.normal(k5, (4, 16, 16), dtype=jnp.bfloat16)
    yb = jax.block_until_ready(DynamicBatchNorm()(xb))
    assert yb.dtype == jnp.bfloat16
    check(yb, xb, 5e-2)

    # Two-pass fallbacks, forced via a tiny budget so N gets chunked with a
    # partial trailing chunk (exercises the accumulate + mask/loop paths).
    limit, _ = _vmem_limit_and_budget()
    ytp3 = jax.block_until_ready(_bn3d_two_pass(xw, limit, 8 * 128 * 28 * 3))
    check(ytp3, xw, 1e-4)
    x2b = jax.random.normal(k6, (20, 8), dtype=jnp.float32)
    ytp2 = jax.block_until_ready(_bn2d_two_pass(x2b, limit, 2000))
    check(ytp2, x2b, 1e-4)

    print("KERNEL_OK")
</pallas_src>

<mosaic_0001>
module attributes {stable_mosaic.version = 11 : i64} {
  func.func @_bn3d_folded_kernel(%arg0: i32, %arg1: memref<4x128xf32, #tpu.memory_space<vmem>>, %arg2: memref<8x128xf32, #tpu.memory_space<vmem>>, %arg3: memref<4x128xf32, #tpu.memory_space<vmem>>) attributes {dimension_semantics = [#tpu.dimension_semantics<parallel>], iteration_bounds = array<i64: 1>, scalar_prefetch = 0 : i64, scratch_operands = 0 : i64, tpu.core_type = #tpu.core_type<tc>, window_params = [{transform_indices = @transform_0, window_bounds = array<i64: 4, 128>}, {pipeline_mode = #tpu.pipeline_mode<synchronous>, transform_indices = @transform_1, window_bounds = array<i64: 8, 128>}, {transform_indices = @transform_2, window_bounds = array<i64: 4, 128>}]} {
    %c0 = arith.constant 0 : index
    %c0_0 = arith.constant 0 : index
    %0 = vector.load %arg1[%c0, %c0_0] : memref<4x128xf32, #tpu.memory_space<vmem>>, vector<4x128xf32>
    %c0_1 = arith.constant 0 : index
    %c0_2 = arith.constant 0 : index
    %1 = vector.load %arg2[%c0_1, %c0_2] : memref<8x128xf32, #tpu.memory_space<vmem>>, vector<8x128xf32>
    %cst = arith.constant dense<0.000000e+00> : vector<128xf32>
    %2 = vector.multi_reduction <add>, %0, %cst [0] : vector<4x128xf32> to vector<128xf32>
    %3 = vector.shape_cast %2 : vector<128xf32> to vector<1x128xf32>
    %cst_3 = arith.constant dense<0.000000e+00> : vector<1x8xf32>
    %4 = tpu.matmul %3, %1, %cst_3 {dimension_numbers = #tpu.dot_dimension_numbers<[1], [1], [0], [0], [0, 0, 1, 0], [], []>, precision = #tpu.contract_precision<fp32>} : vector<1x128xf32>, vector<8x128xf32>, vector<1x8xf32> -> vector<1x8xf32>
    %cst_4 = arith.constant 1.562500e-02 : f32
    %5 = vector.broadcast %cst_4 : f32 to vector<1x8xf32>
    %6 = arith.mulf %4, %5 : vector<1x8xf32>
    %cst_5 = arith.constant dense<0.000000e+00> : vector<1x128xf32>
    %7 = tpu.matmul %6, %1, %cst_5 {dimension_numbers = #tpu.dot_dimension_numbers<[1], [0], [0], [1], [0, 0, 1, 1], [], []>, precision = #tpu.contract_precision<fp32>} : vector<1x8xf32>, vector<8x128xf32>, vector<1x128xf32> -> vector<1x128xf32>
    %8 = vector.broadcast %7 : vector<1x128xf32> to vector<4x128xf32>
    %9 = arith.subf %0, %8 : vector<4x128xf32>
    %10 = arith.mulf %9, %9 : vector<4x128xf32>
    %cst_6 = arith.constant dense<0.000000e+00> : vector<128xf32>
    %11 = vector.multi_reduction <add>, %10, %cst_6 [0] : vector<4x128xf32> to vector<128xf32>
    %12 = vector.shape_cast %11 : vector<128xf32> to vector<1x128xf32>
    %cst_7 = arith.constant dense<0.000000e+00> : vector<1x8xf32>
    %13 = tpu.matmul %12, %1, %cst_7 {dimension_numbers = #tpu.dot_dimension_numbers<[1], [1], [0], [0], [0, 0, 1, 0], [], []>, precision = #tpu.contract_precision<fp32>} : vector<1x128xf32>, vector<8x128xf32>, vector<1x8xf32> -> vector<1x8xf32>
    %cst_8 = arith.constant 1.562500e-02 : f32
    %14 = vector.broadcast %cst_8 : f32 to vector<1x8xf32>
    %15 = arith.mulf %13, %14 : vector<1x8xf32>
    %cst_9 = arith.constant 9.99999974E-6 : f32
    %16 = vector.broadcast %cst_9 : f32 to vector<1x8xf32>
    %17 = arith.addf %15, %16 : vector<1x8xf32>
    %18 = math.rsqrt %17 : vector<1x8xf32>
    %cst_10 = arith.constant dense<0.000000e+00> : vector<1x128xf32>
    %19 = tpu.matmul %18, %1, %cst_10 {dimension_numbers = #tpu.dot_dimension_numbers<[1], [0], [0], [1], [0, 0, 1, 1], [], []>, precision = #tpu.contract_precision<fp32>} : vector<1x8xf32>, vector<8x128xf32>, vector<1x128xf32> -> vector<1x128xf32>
    %20 = vector.broadcast %19 : vector<1x128xf32> to vector<4x128xf32>
    %21 = arith.mulf %9, %20 : vector<4x128xf32>
    %c0_11 = arith.constant 0 : index
    %c0_12 = arith.constant 0 : index
    %22 = vector.load %arg3[%c0_11, %c0_12] : memref<4x128xf32, #tpu.memory_space<vmem>>, vector<4x128xf32>
    tpu.vector_store %arg3[%c0_11, %c0_12], %21 {strides = array<i32>} : memref<4x128xf32, #tpu.memory_space<vmem>>, vector<4x128xf32>,
    return
  }
  func.func @transform_0(%arg0: i32) -> (i32, i32) {
    %c0_i32 = arith.constant 0 : i32
    %c0_i32_0 = arith.constant 0 : i32
    return %c0_i32, %arg0 : i32, i32
  }
  func.func @transform_1(%arg0: i32) -> (i32, i32) {
    %c0_i32 = arith.constant 0 : i32
    %c0_i32_0 = arith.constant 0 : i32
    %c0_i32_1 = arith.constant 0 : i32
    return %c0_i32, %c0_i32_0 : i32, i32
  }
  func.func @transform_2(%arg0: i32) -> (i32, i32) {
    %c0_i32 = arith.constant 0 : i32
    %c0_i32_0 = arith.constant 0 : i32
    return %c0_i32, %arg0 : i32, i32
  }
}

</mosaic_0001>

<llo_original>
// kernel: tpu_custom_call.1
$region0: #{tpu_custom_call.1}
  #allocation0 [shape = 'u32[]', space=smem, size = 0x4, offset = 0x4, fixed_abs, tag = 'smem constant byte address 0x4 - core index']
  #allocation1 [shape = 'u32[144,128]{1,0:T(1,128)}', space=vmem, size = 0x12000, scoped, tag = 'internal scratch']
  %s0 = inlined_call_operand.hbm [shape: f32[4,128], index: 0, kind: input, shape index: {}]
  %s1 = inlined_call_operand.hbm [shape: f32[8,128], index: 1, kind: input, shape index: {}]
  %s2 = inlined_call_operand.hbm [shape: f32[4,128], index: 2, kind: output, shape index: {}]
  %s3 = sld [smem:[#allocation0]]
  $region26: #{tpu_custom_call.1} parent=0
    _
  %s5 = ssub.s32 1, %s3
  %s6 = scalar_select 0, %s5, %s3
  $region1: #{tpu_custom_call.1} parent=0
    #allocation2 [shape = 'u8[2048]{0}', space=vmem, size = 0x800, scoped, tag = 'input window, operand 0, single buffered']
    #allocation3 [shape = 's32[1]{0}', space=sflag, size = 0x4, scoped, tag = 'scoped memory for tpu_custom_call.1']
    #allocation4 [shape = 's32[1]{0}', space=sflag, size = 0x4, scoped, tag = 'scoped memory for tpu_custom_call.1']
    #allocation5 [shape = 'u8[4096]{0}', space=vmem, size = 0x1000, scoped, tag = 'input window, operand 1, single buffered']
    #allocation6 [shape = 's32[1]{0}', space=sflag, size = 0x4, scoped, tag = 'scoped memory for tpu_custom_call.1']
    #allocation7 [shape = 'u8[2048]{0}', space=vmem, size = 0x800, scoped, tag = 'output window, operand 0, single buffered']
    %7 = vsyncpa [#allocation3], 0
    %8 = vsyncpa [#allocation6], 0
    %9 = vsyncpa [#allocation4], 0
    // Predicated region
    $region2: #{tpu_custom_call.1} parent=1 // pred_check
      _
    $region3: #{tpu_custom_call.1} parent=1 // pred_check_branch
      %11 = sbr.rel (0) target = $region5
    $region4: #{tpu_custom_call.1} parent=1 // pred_region
      %s13 = ssub.s32 64, 64
      %14 = vsyncadd [#allocation3], %s13
      %s16 = sshll.u32 [#allocation2], 4
      %s17 = int_to_ptr.vmem [resolvable:$true] %s16
      %19 = dma.hbm_to_vmem [thread:$0]  %s0, 64, %s17, [#allocation3]
    $region5: #{tpu_custom_call.1} parent=1 // pred_fallthru
      _
    // Predicated region
    $region6: #{tpu_custom_call.1} parent=1 // pred_check
      _
    $region7: #{tpu_custom_call.1} parent=1 // pred_check_branch
      %21 = sbr.rel (0) target = $region9
    $region8: #{tpu_custom_call.1} parent=1 // pred_region
      %s23 = ssub.s32 128, 128
      %24 = vsyncadd [#allocation6], %s23
      %s26 = sshll.u32 [#allocation5], 4
      %s27 = int_to_ptr.vmem [resolvable:$true] %s26
      %29 = dma.hbm_to_vmem [thread:$0]  %s1, 128, %s27, [#allocation6]
    $region9: #{tpu_custom_call.1} parent=1 // pred_fallthru
      _
    // Predicated region
    $region10: #{tpu_custom_call.1} parent=1 // pred_check
      _
    $region11: #{tpu_custom_call.1} parent=1 // pred_check_branch
      %31 = sbr.rel (0) target = $region13
    $region12: #{tpu_custom_call.1} parent=1 // pred_region
      %32 = dma.done [#allocation3], 64
    $region13: #{tpu_custom_call.1} parent=1 // pred_fallthru
      _
    // Predicated region
    $region14: #{tpu_custom_call.1} parent=1 // pred_check
      _
    $region15: #{tpu_custom_call.1} parent=1 // pred_check_branch
      %34 = sbr.rel (0) target = $region17
    $region16: #{tpu_custom_call.1} parent=1 // pred_region
      %35 = dma.done [#allocation6], 128
    $region17: #{tpu_custom_call.1} parent=1 // pred_fallthru
      _
    %v36 = vld [vmem:[#allocation2] sm:$0xf]
    %v37 = vld [vmem:[#allocation5] sm:$0xff]
    %vm38 = vcmask 1043456
    %v39 = vsel %vm38, %v36, 0.0
    %v40 = vrot.slane %v39, 4
    %v41 = vadd.f32 %v39, %v40
    %v42 = vrot.slane %v41, 2
    %v43 = vadd.f32 %v41, %v42
    %v44 = vrot.slane %v43, 1
    %v45 = vadd.f32 %v43, %v44
    %46 = vmatprep.subr.mxu0 0.0
    %47 = vmatpush1.xpose.msra.mxu0 0.0
    %48 = vmatprep.subr.mxu0 0.0
    %49 = vmatpush1.xpose.msra.mxu0 0.0
    %50 = vmatprep.subr.mxu0 0.0
    %51 = vmatpush1.xpose.msra.mxu0 0.0
    %52 = vmatprep.subr.mxu0 0.0
    %53 = vmatpush1.xpose.msra.mxu0 0.0
    %54 = vmatprep.subr.mxu0 0.0
    %55 = vmatpush1.xpose.msra.mxu0 0.0
    %56 = vmatprep.subr.mxu0 0.0
    %57 = vmatpush1.xpose.msra.mxu0 0.0
    %58 = vmatprep.subr.mxu0 0.0
    %59 = vmatpush1.xpose.msra.mxu0 0.0
    %60 = vmatprep.subr.mxu0 0.0
    %61 = vmatpush1.xpose.msra.mxu0 0.0
    %62 = vmatprep.subr.mxu0 0.0
    %63 = vmatpush1.xpose.msra.mxu0 0.0
    %64 = vmatprep.subr.mxu0 0.0
    %65 = vmatpush1.xpose.msra.mxu0 0.0
    %66 = vmatprep.subr.mxu0 0.0
    %67 = vmatpush1.xpose.msra.mxu0 0.0
    %68 = vmatprep.subr.mxu0 0.0
    %69 = vmatpush1.xpose.msra.mxu0 0.0
    %70 = vmatprep.subr.mxu0 0.0
    %71 = vmatpush1.xpose.msra.mxu0 0.0
    %72 = vmatprep.subr.mxu0 0.0
    %73 = vmatpush1.xpose.msra.mxu0 0.0
    %74 = vmatprep.subr.mxu0 0.0
    %75 = vmatpush1.xpose.msra.mxu0 0.0
    %76 = vmatprep.subr.mxu0 0.0
    %v77 = vand.u32 %v37, 4294901760
    %78 = vmatpush1.xpose.msra.mxu0 %v77
    %79 = vmatprep.subr.mxu0 0.0
    %80 = vmatpush2.xpose.msra.mxu0 0.0
    %81 = vmatprep.subr.mxu0 0.0
    %82 = vmatpush2.xpose.msra.mxu0 0.0
    %83 = vmatprep.subr.mxu0 0.0
    %84 = vmatpush2.xpose.msra.mxu0 0.0
    %85 = vmatprep.subr.mxu0 0.0
    %86 = vmatpush2.xpose.msra.mxu0 0.0
    %87 = vmatprep.subr.mxu0 0.0
    %88 = vmatpush2.xpose.msra.mxu0 0.0
    %89 = vmatprep.subr.mxu0 0.0
    %90 = vmatpush2.xpose.msra.mxu0 0.0
    %91 = vmatprep.subr.mxu0 0.0
    %92 = vmatpush2.xpose.msra.mxu0 0.0
    %93 = vmatprep.subr.mxu0 0.0
    %94 = vmatpush2.xpose.msra.mxu0 0.0
    %95 = vmatprep.subr.mxu0 0.0
    %96 = vmatpush2.xpose.msra.mxu0 0.0
    %97 = vmatprep.subr.mxu0 0.0
    %98 = vmatpush2.xpose.msra.mxu0 0.0
    %99 = vmatprep.subr.mxu0 0.0
    %100 = vmatpush2.xpose.msra.mxu0 0.0
    %101 = vmatprep.subr.mxu0 0.0
    %102 = vmatpush2.xpose.msra.mxu0 0.0
    %103 = vmatprep.subr.mxu0 0.0
    %104 = vmatpush2.xpose.msra.mxu0 0.0
    %105 = vmatprep.subr.mxu0 0.0
    %106 = vmatpush2.xpose.msra.mxu0 0.0
    %107 = vmatprep.subr.mxu0 0.0
    %108 = vmatpush2.xpose.msra.mxu0 0.0
    %109 = vmatprep.subr.mxu0 0.0
    %110 = vmatpush2.xpose.msra.mxu0 0.0
    %111 = vmatprep.mubr.f32.mxu0 0.0
    %v112 = vand.u32 %v45, 4294901760
    %v113 = vsub.f32 %v45, %v112
    %v114 = vand.u32 %v113, 4294901760
    %v115 = vsub.f32 %v113, %v114
    %v116 = vand.u32 %v115, 4294901760
    %117 = vmatmul.mubr.f32.gmra.mxu0 %v116
    %v118 = vpop.f32.mrf.mxu0
    %v119 = vadd.f32 0.0, %v118
    %v120 = vpop.f32.mrf.mxu0
    %121 = vdwg.mxu0
    %122 = vmatprep.subr.mxu0 0.0
    %123 = vmatpush1.xpose.msra.mxu0 0.0
    %124 = vmatprep.subr.mxu0 0.0
    %125 = vmatpush1.xpose.msra.mxu0 0.0
    %126 = vmatprep.subr.mxu0 0.0
    %127 = vmatpush1.xpose.msra.mxu0 0.0
    %128 = vmatprep.subr.mxu0 0.0
    %129 = vmatpush1.xpose.msra.mxu0 0.0
    %130 = vmatprep.subr.mxu0 0.0
    %131 = vmatpush1.xpose.msra.mxu0 0.0
    %132 = vmatprep.subr.mxu0 0.0
    %133 = vmatpush1.xpose.msra.mxu0 0.0
    %134 = vmatprep.subr.mxu0 0.0
    %135 = vmatpush1.xpose.msra.mxu0 0.0
    %136 = vmatprep.subr.mxu0 0.0
    %137 = vmatpush1.xpose.msra.mxu0 0.0
    %138 = vmatprep.subr.mxu0 0.0
    %139 = vmatpush1.xpose.msra.mxu0 0.0
    %140 = vmatprep.subr.mxu0 0.0
    %141 = vmatpush1.xpose.msra.mxu0 0.0
    %142 = vmatprep.subr.mxu0 0.0
    %143 = vmatpush1.xpose.msra.mxu0 0.0
    %144 = vmatprep.subr.mxu0 0.0
    %145 = vmatpush1.xpose.msra.mxu0 0.0
    %146 = vmatprep.subr.mxu0 0.0
    %147 = vmatpush1.xpose.msra.mxu0 0.0
    %148 = vmatprep.subr.mxu0 0.0
    %149 = vmatpush1.xpose.msra.mxu0 0.0
    %150 = vmatprep.subr.mxu0 0.0
    %151 = vmatpush1.xpose.msra.mxu0 0.0
    %152 = vmatprep.subr.mxu0 0.0
    %v153 = vand.u32 %v37, 4294901760
    %v154 = vsub.f32 %v37, %v153
    %v155 = vand.u32 %v154, 4294901760
    %v156 = vsub.f32 %v154, %v155
    %v157 = vand.u32 %v156, 4294901760
    %158 = vmatpush1.xpose.msra.mxu0 %v157
    %159 = vmatprep.subr.mxu0 0.0
    %160 = vmatpush2.xpose.msra.mxu0 0.0
    %161 = vmatprep.subr.mxu0 0.0
    %162 = vmatpush2.xpose.msra.mxu0 0.0
    %163 = vmatprep.subr.mxu0 0.0
    %164 = vmatpush2.xpose.msra.mxu0 0.0
    %165 = vmatprep.subr.mxu0 0.0
    %166 = vmatpush2.xpose.msra.mxu0 0.0
    %167 = vmatprep.subr.mxu0 0.0
    %168 = vmatpush2.xpose.msra.mxu0 0.0
    %169 = vmatprep.subr.mxu0 0.0
    %170 = vmatpush2.xpose.msra.mxu0 0.0
    %171 = vmatprep.subr.mxu0 0.0
    %172 = vmatpush2.xpose.msra.mxu0 0.0
    %173 = vmatprep.subr.mxu0 0.0
    %174 = vmatpush2.xpose.msra.mxu0 0.0
    %175 = vmatprep.subr.mxu0 0.0
    %176 = vmatpush2.xpose.msra.mxu0 0.0
    %177 = vmatprep.subr.mxu0 0.0
    %178 = vmatpush2.xpose.msra.mxu0 0.0
    %179 = vmatprep.subr.mxu0 0.0
    %180 = vmatpush2.xpose.msra.mxu0 0.0
    %181 = vmatprep.subr.mxu0 0.0
    %182 = vmatpush2.xpose.msra.mxu0 0.0
    %183 = vmatprep.subr.mxu0 0.0
    %184 = vmatpush2.xpose.msra.mxu0 0.0
    %185 = vmatprep.subr.mxu0 0.0
    %186 = vmatpush2.xpose.msra.mxu0 0.0
    %187 = vmatprep.subr.mxu0 0.0
    %188 = vmatpush2.xpose.msra.mxu0 0.0
    %189 = vmatprep.subr.mxu0 0.0
    %190 = vmatpush2.xpose.msra.mxu0 0.0
    %191 = vmatprep.mubr.f32.mxu0 0.0
    %v192 = vand.u32 %v45, 4294901760
    %193 = vmatmul.mubr.f32.gmra.mxu0 %v192
    %v194 = vpop.f32.mrf.mxu0
    %v195 = vadd.f32 %v119, %v194
    %v196 = vpop.f32.mrf.mxu0
    %197 = vdwg.mxu0
    %198 = vmatprep.subr.mxu0 0.0
    %199 = vmatpush1.xpose.msra.mxu0 0.0
    %200 = vmatprep.subr.mxu0 0.0
    %201 = vmatpush1.xpose.msra.mxu0 0.0
    %202 = vmatprep.subr.mxu0 0.0
    %203 = vmatpush1.xpose.msra.mxu0 0.0
    %204 = vmatprep.subr.mxu0 0.0
    %205 = vmatpush1.xpose.msra.mxu0 0.0
    %206 = vmatprep.subr.mxu0 0.0
    %207 = vmatpush1.xpose.msra.mxu0 0.0
    %208 = vmatprep.subr.mxu0 0.0
    %209 = vmatpush1.xpose.msra.mxu0 0.0
    %210 = vmatprep.subr.mxu0 0.0
    %211 = vmatpush1.xpose.msra.mxu0 0.0
    %212 = vmatprep.subr.mxu0 0.0
    %213 = vmatpush1.xpose.msra.mxu0 0.0
    %214 = vmatprep.subr.mxu0 0.0
    %215 = vmatpush1.xpose.msra.mxu0 0.0
    %216 = vmatprep.subr.mxu0 0.0
    %217 = vmatpush1.xpose.msra.mxu0 0.0
    %218 = vmatprep.subr.mxu0 0.0
    %219 = vmatpush1.xpose.msra.mxu0 0.0
    %220 = vmatprep.subr.mxu0 0.0
    %221 = vmatpush1.xpose.msra.mxu0 0.0
    %222 = vmatprep.subr.mxu0 0.0
    %223 = vmatpush1.xpose.msra.mxu0 0.0
    %224 = vmatprep.subr.mxu0 0.0
    %225 = vmatpush1.xpose.msra.mxu0 0.0
    %226 = vmatprep.subr.mxu0 0.0
    %227 = vmatpush1.xpose.msra.mxu0 0.0
    %228 = vmatprep.subr.mxu0 0.0
    %v229 = vand.u32 %v37, 4294901760
    %v230 = vsub.f32 %v37, %v229
    %231 = vmatpush1.xpose.msra.mxu0 %v230
    %232 = vmatprep.subr.mxu0 0.0
    %233 = vmatpush2.xpose.msra.mxu0 0.0
    %234 = vmatprep.subr.mxu0 0.0
    %235 = vmatpush2.xpose.msra.mxu0 0.0
    %236 = vmatprep.subr.mxu0 0.0
    %237 = vmatpush2.xpose.msra.mxu0 0.0
    %238 = vmatprep.subr.mxu0 0.0
    %239 = vmatpush2.xpose.msra.mxu0 0.0
    %240 = vmatprep.subr.mxu0 0.0
    %241 = vmatpush2.xpose.msra.mxu0 0.0
    %242 = vmatprep.subr.mxu0 0.0
    %243 = vmatpush2.xpose.msra.mxu0 0.0
    %244 = vmatprep.subr.mxu0 0.0
    %245 = vmatpush2.xpose.msra.mxu0 0.0
    %246 = vmatprep.subr.mxu0 0.0
    %247 = vmatpush2.xpose.msra.mxu0 0.0
    %248 = vmatprep.subr.mxu0 0.0
    %249 = vmatpush2.xpose.msra.mxu0 0.0
    %250 = vmatprep.subr.mxu0 0.0
    %251 = vmatpush2.xpose.msra.mxu0 0.0
    %252 = vmatprep.subr.mxu0 0.0
    %253 = vmatpush2.xpose.msra.mxu0 0.0
    %254 = vmatprep.subr.mxu0 0.0
    %255 = vmatpush2.xpose.msra.mxu0 0.0
    %256 = vmatprep.subr.mxu0 0.0
    %257 = vmatpush2.xpose.msra.mxu0 0.0
    %258 = vmatprep.subr.mxu0 0.0
    %259 = vmatpush2.xpose.msra.mxu0 0.0
    %260 = vmatprep.subr.mxu0 0.0
    %261 = vmatpush2.xpose.msra.mxu0 0.0
    %262 = vmatprep.subr.mxu0 0.0
    %263 = vmatpush2.xpose.msra.mxu0 0.0
    %264 = vmatprep.mubr.f32.mxu0 0.0
    %v265 = vand.u32 %v45, 4294901760
    %v266 = vsub.f32 %v45, %v265
    %267 = vmatmul.mubr.f32.gmra.mxu0 %v266
    %v268 = vpop.f32.mrf.mxu0
    %v269 = vadd.f32 %v195, %v268
    %v270 = vpop.f32.mrf.mxu0
    %271 = vdwg.mxu0
    %272 = vmatprep.subr.mxu0 0.0
    %273 = vmatpush1.xpose.msra.mxu0 0.0
    %274 = vmatprep.subr.mxu0 0.0
    %275 = vmatpush1.xpose.msra.mxu0 0.0
    %276 = vmatprep.subr.mxu0 0.0
    %277 = vmatpush1.xpose.msra.mxu0 0.0
    %278 = vmatprep.subr.mxu0 0.0
    %279 = vmatpush1.xpose.msra.mxu0 0.0
    %280 = vmatprep.subr.mxu0 0.0
    %281 = vmatpush1.xpose.msra.mxu0 0.0
    %282 = vmatprep.subr.mxu0 0.0
    %283 = vmatpush1.xpose.msra.mxu0 0.0
    %284 = vmatprep.subr.mxu0 0.0
    %285 = vmatpush1.xpose.msra.mxu0 0.0
    %286 = vmatprep.subr.mxu0 0.0
    %287 = vmatpush1.xpose.msra.mxu0 0.0
    %288 = vmatprep.subr.mxu0 0.0
    %289 = vmatpush1.xpose.msra.mxu0 0.0
    %290 = vmatprep.subr.mxu0 0.0
    %291 = vmatpush1.xpose.msra.mxu0 0.0
    %292 = vmatprep.subr.mxu0 0.0
    %293 = vmatpush1.xpose.msra.mxu0 0.0
    %294 = vmatprep.subr.mxu0 0.0
    %295 = vmatpush1.xpose.msra.mxu0 0.0
    %296 = vmatprep.subr.mxu0 0.0
    %297 = vmatpush1.xpose.msra.mxu0 0.0
    %298 = vmatprep.subr.mxu0 0.0
    %299 = vmatpush1.xpose.msra.mxu0 0.0
    %300 = vmatprep.subr.mxu0 0.0
    %301 = vmatpush1.xpose.msra.mxu0 0.0
    %302 = vmatprep.subr.mxu0 0.0
    %v303 = vand.u32 %v37, 4294901760
    %304 = vmatpush1.xpose.msra.mxu0 %v303
    %305 = vmatprep.subr.mxu0 0.0
    %306 = vmatpush2.xpose.msra.mxu0 0.0
    %307 = vmatprep.subr.mxu0 0.0
    %308 = vmatpush2.xpose.msra.mxu0 0.0
    %309 = vmatprep.subr.mxu0 0.0
    %310 = vmatpush2.xpose.msra.mxu0 0.0
    %311 = vmatprep.subr.mxu0 0.0
    %312 = vmatpush2.xpose.msra.mxu0 0.0
    %313 = vmatprep.subr.mxu0 0.0
    %314 = vmatpush2.xpose.msra.mxu0 0.0
    %315 = vmatprep.subr.mxu0 0.0
    %316 = vmatpush2.xpose.msra.mxu0 0.0
    %317 = vmatprep.subr.mxu0 0.0
    %318 = vmatpush2.xpose.msra.mxu0 0.0
    %319 = vmatprep.subr.mxu0 0.0
    %320 = vmatpush2.xpose.msra.mxu0 0.0
    %321 = vmatprep.subr.mxu0 0.0
    %322 = vmatpush2.xpose.msra.mxu0 0.0
    %323 = vmatprep.subr.mxu0 0.0
    %324 = vmatpush2.xpose.msra.mxu0 0.0
    %325 = vmatprep.subr.mxu0 0.0
    %326 = vmatpush2.xpose.msra.mxu0 0.0
    %327 = vmatprep.subr.mxu0 0.0
    %328 = vmatpush2.xpose.msra.mxu0 0.0
    %329 = vmatprep.subr.mxu0 0.0
    %330 = vmatpush2.xpose.msra.mxu0 0.0
    %331 = vmatprep.subr.mxu0 0.0
    %332 = vmatpush2.xpose.msra.mxu0 0.0
    %333 = vmatprep.subr.mxu0 0.0
    %334 = vmatpush2.xpose.msra.mxu0 0.0
    %335 = vmatprep.subr.mxu0 0.0
    %336 = vmatpush2.xpose.msra.mxu0 0.0
    %337 = vmatprep.mubr.f32.mxu0 0.0
    %v338 = vand.u32 %v45, 4294901760
    %v339 = vsub.f32 %v45, %v338
    %v340 = vand.u32 %v339, 4294901760
    %341 = vmatmul.mubr.f32.gmra.mxu0 %v340
    %v342 = vpop.f32.mrf.mxu0
    %v343 = vadd.f32 %v269, %v342
    %v344 = vpop.f32.mrf.mxu0
    %345 = vdwg.mxu0
    %346 = vmatprep.subr.mxu0 0.0
    %347 = vmatpush1.xpose.msra.mxu0 0.0
    %348 = vmatprep.subr.mxu0 0.0
    %349 = vmatpush1.xpose.msra.mxu0 0.0
    %350 = vmatprep.subr.mxu0 0.0
    %351 = vmatpush1.xpose.msra.mxu0 0.0
    %352 = vmatprep.subr.mxu0 0.0
    %353 = vmatpush1.xpose.msra.mxu0 0.0
    %354 = vmatprep.subr.mxu0 0.0
    %355 = vmatpush1.xpose.msra.mxu0 0.0
    %356 = vmatprep.subr.mxu0 0.0
    %357 = vmatpush1.xpose.msra.mxu0 0.0
    %358 = vmatprep.subr.mxu0 0.0
    %359 = vmatpush1.xpose.msra.mxu0 0.0
    %360 = vmatprep.subr.mxu0 0.0
    %361 = vmatpush1.xpose.msra.mxu0 0.0
    %362 = vmatprep.subr.mxu0 0.0
    %363 = vmatpush1.xpose.msra.mxu0 0.0
    %364 = vmatprep.subr.mxu0 0.0
    %365 = vmatpush1.xpose.msra.mxu0 0.0
    %366 = vmatprep.subr.mxu0 0.0
    %367 = vmatpush1.xpose.msra.mxu0 0.0
    %368 = vmatprep.subr.mxu0 0.0
    %369 = vmatpush1.xpose.msra.mxu0 0.0
    %370 = vmatprep.subr.mxu0 0.0
    %371 = vmatpush1.xpose.msra.mxu0 0.0
    %372 = vmatprep.subr.mxu0 0.0
    %373 = vmatpush1.xpose.msra.mxu0 0.0
    %374 = vmatprep.subr.mxu0 0.0
    %375 = vmatpush1.xpose.msra.mxu0 0.0
    %376 = vmatprep.subr.mxu0 0.0
    %v377 = vand.u32 %v37, 4294901760
    %v378 = vsub.f32 %v37, %v377
    %v379 = vand.u32 %v378, 4294901760
    %380 = vmatpush1.xpose.msra.mxu0 %v379
    %381 = vmatprep.subr.mxu0 0.0
    %382 = vmatpush2.xpose.msra.mxu0 0.0
    %383 = vmatprep.subr.mxu0 0.0
    %384 = vmatpush2.xpose.msra.mxu0 0.0
    %385 = vmatprep.subr.mxu0 0.0
    %386 = vmatpush2.xpose.msra.mxu0 0.0
    %387 = vmatprep.subr.mxu0 0.0
    %388 = vmatpush2.xpose.msra.mxu0 0.0
    %389 = vmatprep.subr.mxu0 0.0
    %390 = vmatpush2.xpose.msra.mxu0 0.0
    %391 = vmatprep.subr.mxu0 0.0
    %392 = vmatpush2.xpose.msra.mxu0 0.0
    %393 = vmatprep.subr.mxu0 0.0
    %394 = vmatpush2.xpose.msra.mxu0 0.0
    %395 = vmatprep.subr.mxu0 0.0
    %396 = vmatpush2.xpose.msra.mxu0 0.0
    %397 = vmatprep.subr.mxu0 0.0
    %398 = vmatpush2.xpose.msra.mxu0 0.0
    %399 = vmatprep.subr.mxu0 0.0
    %400 = vmatpush2.xpose.msra.mxu0 0.0
    %401 = vmatprep.subr.mxu0 0.0
    %402 = vmatpush2.xpose.msra.mxu0 0.0
    %403 = vmatprep.subr.mxu0 0.0
    %404 = vmatpush2.xpose.msra.mxu0 0.0
    %405 = vmatprep.subr.mxu0 0.0
    %406 = vmatpush2.xpose.msra.mxu0 0.0
    %407 = vmatprep.subr.mxu0 0.0
    %408 = vmatpush2.xpose.msra.mxu0 0.0
    %409 = vmatprep.subr.mxu0 0.0
    %410 = vmatpush2.xpose.msra.mxu0 0.0
    %411 = vmatprep.subr.mxu0 0.0
    %412 = vmatpush2.xpose.msra.mxu0 0.0
    %413 = vmatprep.mubr.f32.mxu0 0.0
    %v414 = vand.u32 %v45, 4294901760
    %415 = vmatmul.mubr.f32.gmra.mxu0 %v414
    %v416 = vpop.f32.mrf.mxu0
    %v417 = vadd.f32 %v343, %v416
    %v418 = vpop.f32.mrf.mxu0
    %419 = vdwg.mxu0
    %420 = vmatprep.subr.mxu0 0.0
    %421 = vmatpush1.xpose.msra.mxu0 0.0
    %422 = vmatprep.subr.mxu0 0.0
    %423 = vmatpush1.xpose.msra.mxu0 0.0
    %424 = vmatprep.subr.mxu0 0.0
    %425 = vmatpush1.xpose.msra.mxu0 0.0
    %426 = vmatprep.subr.mxu0 0.0
    %427 = vmatpush1.xpose.msra.mxu0 0.0
    %428 = vmatprep.subr.mxu0 0.0
    %429 = vmatpush1.xpose.msra.mxu0 0.0
    %430 = vmatprep.subr.mxu0 0.0
    %431 = vmatpush1.xpose.msra.mxu0 0.0
    %432 = vmatprep.subr.mxu0 0.0
    %433 = vmatpush1.xpose.msra.mxu0 0.0
    %434 = vmatprep.subr.mxu0 0.0
    %435 = vmatpush1.xpose.msra.mxu0 0.0
    %436 = vmatprep.subr.mxu0 0.0
    %437 = vmatpush1.xpose.msra.mxu0 0.0
    %438 = vmatprep.subr.mxu0 0.0
    %439 = vmatpush1.xpose.msra.mxu0 0.0
    %440 = vmatprep.subr.mxu0 0.0
    %441 = vmatpush1.xpose.msra.mxu0 0.0
    %442 = vmatprep.subr.mxu0 0.0
    %443 = vmatpush1.xpose.msra.mxu0 0.0
    %444 = vmatprep.subr.mxu0 0.0
    %445 = vmatpush1.xpose.msra.mxu0 0.0
    %446 = vmatprep.subr.mxu0 0.0
    %447 = vmatpush1.xpose.msra.mxu0 0.0
    %448 = vmatprep.subr.mxu0 0.0
    %449 = vmatpush1.xpose.msra.mxu0 0.0
    %450 = vmatprep.subr.mxu0 0.0
    %v451 = vand.u32 %v37, 4294901760
    %452 = vmatpush1.xpose.msra.mxu0 %v451
    %453 = vmatprep.subr.mxu0 0.0
    %454 = vmatpush2.xpose.msra.mxu0 0.0
    %455 = vmatprep.subr.mxu0 0.0
    %456 = vmatpush2.xpose.msra.mxu0 0.0
    %457 = vmatprep.subr.mxu0 0.0
    %458 = vmatpush2.xpose.msra.mxu0 0.0
    %459 = vmatprep.subr.mxu0 0.0
    %460 = vmatpush2.xpose.msra.mxu0 0.0
    %461 = vmatprep.subr.mxu0 0.0
    %462 = vmatpush2.xpose.msra.mxu0 0.0
    %463 = vmatprep.subr.mxu0 0.0
    %464 = vmatpush2.xpose.msra.mxu0 0.0
    %465 = vmatprep.subr.mxu0 0.0
    %466 = vmatpush2.xpose.msra.mxu0 0.0
    %467 = vmatprep.subr.mxu0 0.0
    %468 = vmatpush2.xpose.msra.mxu0 0.0
    %469 = vmatprep.subr.mxu0 0.0
    %470 = vmatpush2.xpose.msra.mxu0 0.0
    %471 = vmatprep.subr.mxu0 0.0
    %472 = vmatpush2.xpose.msra.mxu0 0.0
    %473 = vmatprep.subr.mxu0 0.0
    %474 = vmatpush2.xpose.msra.mxu0 0.0
    %475 = vmatprep.subr.mxu0 0.0
    %476 = vmatpush2.xpose.msra.mxu0 0.0
    %477 = vmatprep.subr.mxu0 0.0
    %478 = vmatpush2.xpose.msra.mxu0 0.0
    %479 = vmatprep.subr.mxu0 0.0
    %480 = vmatpush2.xpose.msra.mxu0 0.0
    %481 = vmatprep.subr.mxu0 0.0
    %482 = vmatpush2.xpose.msra.mxu0 0.0
    %483 = vmatprep.subr.mxu0 0.0
    %484 = vmatpush2.xpose.msra.mxu0 0.0
    %485 = vmatprep.mubr.f32.mxu0 0.0
    %v486 = vand.u32 %v45, 4294901760
    %487 = vmatmul.mubr.f32.gmra.mxu0 %v486
    %v488 = vpop.f32.mrf.mxu0
    %v489 = vadd.f32 %v417, %v488
    %v490 = vpop.f32.mrf.mxu0
    %491 = vdwg.mxu0
    %v492 = vmul.f32 %v489, 0.015625
    %vm493 = vcmask 64512
    %v495 = vsel %vm493, %v492, 0
    %497 = vmatprep.subr.mxu0 0.0
    %498 = vmatpush1.msra.mxu0 0.0
    %499 = vmatprep.subr.mxu0 0.0
    %500 = vmatpush1.msra.mxu0 0.0
    %501 = vmatprep.subr.mxu0 0.0
    %502 = vmatpush1.msra.mxu0 0.0
    %503 = vmatprep.subr.mxu0 0.0
    %504 = vmatpush1.msra.mxu0 0.0
    %505 = vmatprep.subr.mxu0 0.0
    %506 = vmatpush1.msra.mxu0 0.0
    %507 = vmatprep.subr.mxu0 0.0
    %508 = vmatpush1.msra.mxu0 0.0
    %509 = vmatprep.subr.mxu0 0.0
    %510 = vmatpush1.msra.mxu0 0.0
    %511 = vmatprep.subr.mxu0 0.0
    %512 = vmatpush1.msra.mxu0 0.0
    %513 = vmatprep.subr.mxu0 0.0
    %514 = vmatpush1.msra.mxu0 0.0
    %515 = vmatprep.subr.mxu0 0.0
    %516 = vmatpush1.msra.mxu0 0.0
    %517 = vmatprep.subr.mxu0 0.0
    %518 = vmatpush1.msra.mxu0 0.0
    %519 = vmatprep.subr.mxu0 0.0
    %520 = vmatpush1.msra.mxu0 0.0
    %521 = vmatprep.subr.mxu0 0.0
    %522 = vmatpush1.msra.mxu0 0.0
    %523 = vmatprep.subr.mxu0 0.0
    %524 = vmatpush1.msra.mxu0 0.0
    %525 = vmatprep.subr.mxu0 0.0
    %526 = vmatpush1.msra.mxu0 0.0
    %527 = vmatprep.subr.mxu0 0.0
    %v528 = vand.u32 %v37, 4294901760
    %529 = vmatpush1.msra.mxu0 %v528
    %530 = vmatprep.subr.mxu0 0.0
    %531 = vmatpush2.msra.mxu0 0.0
    %532 = vmatprep.subr.mxu0 0.0
    %533 = vmatpush2.msra.mxu0 0.0
    %534 = vmatprep.subr.mxu0 0.0
    %535 = vmatpush2.msra.mxu0 0.0
    %536 = vmatprep.subr.mxu0 0.0
    %537 = vmatpush2.msra.mxu0 0.0
    %538 = vmatprep.subr.mxu0 0.0
    %539 = vmatpush2.msra.mxu0 0.0
    %540 = vmatprep.subr.mxu0 0.0
    %541 = vmatpush2.msra.mxu0 0.0
    %542 = vmatprep.subr.mxu0 0.0
    %543 = vmatpush2.msra.mxu0 0.0
    %544 = vmatprep.subr.mxu0 0.0
    %545 = vmatpush2.msra.mxu0 0.0
    %546 = vmatprep.subr.mxu0 0.0
    %547 = vmatpush2.msra.mxu0 0.0
    %548 = vmatprep.subr.mxu0 0.0
    %549 = vmatpush2.msra.mxu0 0.0
    %550 = vmatprep.subr.mxu0 0.0
    %551 = vmatpush2.msra.mxu0 0.0
    %552 = vmatprep.subr.mxu0 0.0
    %553 = vmatpush2.msra.mxu0 0.0
    %554 = vmatprep.subr.mxu0 0.0
    %555 = vmatpush2.msra.mxu0 0.0
    %556 = vmatprep.subr.mxu0 0.0
    %557 = vmatpush2.msra.mxu0 0.0
    %558 = vmatprep.subr.mxu0 0.0
    %559 = vmatpush2.msra.mxu0 0.0
    %560 = vmatprep.subr.mxu0 0.0
    %561 = vmatpush2.msra.mxu0 0.0
    %562 = vmatprep.mubr.f32.mxu0 0.0
    %v563 = vand.u32 %v495, 4294901760
    %v564 = vsub.f32 %v495, %v563
    %v565 = vand.u32 %v564, 4294901760
    %v566 = vsub.f32 %v564, %v565
    %v567 = vand.u32 %v566, 4294901760
    %568 = vmatmul.mubr.f32.gmra.mxu0 %v567
    %v569 = vpop.f32.mrf.mxu0
    %v570 = vadd.f32 0.0, %v569
    %v571 = vpop.f32.mrf.mxu0
    %572 = vdwg.mxu0
    %573 = vmatprep.subr.mxu0 0.0
    %574 = vmatpush1.msra.mxu0 0.0
    %575 = vmatprep.subr.mxu0 0.0
    %576 = vmatpush1.msra.mxu0 0.0
    %577 = vmatprep.subr.mxu0 0.0
    %578 = vmatpush1.msra.mxu0 0.0
    %579 = vmatprep.subr.mxu0 0.0
    %580 = vmatpush1.msra.mxu0 0.0
    %581 = vmatprep.subr.mxu0 0.0
    %582 = vmatpush1.msra.mxu0 0.0
    %583 = vmatprep.subr.mxu0 0.0
    %584 = vmatpush1.msra.mxu0 0.0
    %585 = vmatprep.subr.mxu0 0.0
    %586 = vmatpush1.msra.mxu0 0.0
    %587 = vmatprep.subr.mxu0 0.0
    %588 = vmatpush1.msra.mxu0 0.0
    %589 = vmatprep.subr.mxu0 0.0
    %590 = vmatpush1.msra.mxu0 0.0
    %591 = vmatprep.subr.mxu0 0.0
    %592 = vmatpush1.msra.mxu0 0.0
    %593 = vmatprep.subr.mxu0 0.0
    %594 = vmatpush1.msra.mxu0 0.0
    %595 = vmatprep.subr.mxu0 0.0
    %596 = vmatpush1.msra.mxu0 0.0
    %597 = vmatprep.subr.mxu0 0.0
    %598 = vmatpush1.msra.mxu0 0.0
    %599 = vmatprep.subr.mxu0 0.0
    %600 = vmatpush1.msra.mxu0 0.0
    %601 = vmatprep.subr.mxu0 0.0
    %602 = vmatpush1.msra.mxu0 0.0
    %603 = vmatprep.subr.mxu0 0.0
    %v604 = vand.u32 %v37, 4294901760
    %v605 = vsub.f32 %v37, %v604
    %v606 = vand.u32 %v605, 4294901760
    %v607 = vsub.f32 %v605, %v606
    %v608 = vand.u32 %v607, 4294901760
    %609 = vmatpush1.msra.mxu0 %v608
    %610 = vmatprep.subr.mxu0 0.0
    %611 = vmatpush2.msra.mxu0 0.0
    %612 = vmatprep.subr.mxu0 0.0
    %613 = vmatpush2.msra.mxu0 0.0
    %614 = vmatprep.subr.mxu0 0.0
    %615 = vmatpush2.msra.mxu0 0.0
    %616 = vmatprep.subr.mxu0 0.0
    %617 = vmatpush2.msra.mxu0 0.0
    %618 = vmatprep.subr.mxu0 0.0
    %619 = vmatpush2.msra.mxu0 0.0
    %620 = vmatprep.subr.mxu0 0.0
    %621 = vmatpush2.msra.mxu0 0.0
    %622 = vmatprep.subr.mxu0 0.0
    %623 = vmatpush2.msra.mxu0 0.0
    %624 = vmatprep.subr.mxu0 0.0
    %625 = vmatpush2.msra.mxu0 0.0
    %626 = vmatprep.subr.mxu0 0.0
    %627 = vmatpush2.msra.mxu0 0.0
    %628 = vmatprep.subr.mxu0 0.0
    %629 = vmatpush2.msra.mxu0 0.0
    %630 = vmatprep.subr.mxu0 0.0
    %631 = vmatpush2.msra.mxu0 0.0
    %632 = vmatprep.subr.mxu0 0.0
    %633 = vmatpush2.msra.mxu0 0.0
    %634 = vmatprep.subr.mxu0 0.0
    %635 = vmatpush2.msra.mxu0 0.0
    %636 = vmatprep.subr.mxu0 0.0
    %637 = vmatpush2.msra.mxu0 0.0
    %638 = vmatprep.subr.mxu0 0.0
    %639 = vmatpush2.msra.mxu0 0.0
    %640 = vmatprep.subr.mxu0 0.0
    %641 = vmatpush2.msra.mxu0 0.0
    %642 = vmatprep.mubr.f32.mxu0 0.0
    %v643 = vand.u32 %v495, 4294901760
    %644 = vmatmul.mubr.f32.gmra.mxu0 %v643
    %v645 = vpop.f32.mrf.mxu0
    %v646 = vadd.f32 %v570, %v645
    %v647 = vpop.f32.mrf.mxu0
    %648 = vdwg.mxu0
    %649 = vmatprep.subr.mxu0 0.0
    %650 = vmatpush1.msra.mxu0 0.0
    %651 = vmatprep.subr.mxu0 0.0
    %652 = vmatpush1.msra.mxu0 0.0
    %653 = vmatprep.subr.mxu0 0.0
    %654 = vmatpush1.msra.mxu0 0.0
    %655 = vmatprep.subr.mxu0 0.0
    %656 = vmatpush1.msra.mxu0 0.0
    %657 = vmatprep.subr.mxu0 0.0
    %658 = vmatpush1.msra.mxu0 0.0
    %659 = vmatprep.subr.mxu0 0.0
    %660 = vmatpush1.msra.mxu0 0.0
    %661 = vmatprep.subr.mxu0 0.0
    %662 = vmatpush1.msra.mxu0 0.0
    %663 = vmatprep.subr.mxu0 0.0
    %664 = vmatpush1.msra.mxu0 0.0
    %665 = vmatprep.subr.mxu0 0.0
    %666 = vmatpush1.msra.mxu0 0.0
    %667 = vmatprep.subr.mxu0 0.0
    %668 = vmatpush1.msra.mxu0 0.0
    %669 = vmatprep.subr.mxu0 0.0
    %670 = vmatpush1.msra.mxu0 0.0
    %671 = vmatprep.subr.mxu0 0.0
    %672 = vmatpush1.msra.mxu0 0.0
    %673 = vmatprep.subr.mxu0 0.0
    %674 = vmatpush1.msra.mxu0 0.0
    %675 = vmatprep.subr.mxu0 0.0
    %676 = vmatpush1.msra.mxu0 0.0
    %677 = vmatprep.subr.mxu0 0.0
    %678 = vmatpush1.msra.mxu0 0.0
    %679 = vmatprep.subr.mxu0 0.0
    %v680 = vand.u32 %v37, 4294901760
    %v681 = vsub.f32 %v37, %v680
    %682 = vmatpush1.msra.mxu0 %v681
    %683 = vmatprep.subr.mxu0 0.0
    %684 = vmatpush2.msra.mxu0 0.0
    %685 = vmatprep.subr.mxu0 0.0
    %686 = vmatpush2.msra.mxu0 0.0
    %687 = vmatprep.subr.mxu0 0.0
    %688 = vmatpush2.msra.mxu0 0.0
    %689 = vmatprep.subr.mxu0 0.0
    %690 = vmatpush2.msra.mxu0 0.0
    %691 = vmatprep.subr.mxu0 0.0
    %692 = vmatpush2.msra.mxu0 0.0
    %693 = vmatprep.subr.mxu0 0.0
    %694 = vmatpush2.msra.mxu0 0.0
    %695 = vmatprep.subr.mxu0 0.0
    %696 = vmatpush2.msra.mxu0 0.0
    %697 = vmatprep.subr.mxu0 0.0
    %698 = vmatpush2.msra.mxu0 0.0
    %699 = vmatprep.subr.mxu0 0.0
    %700 = vmatpush2.msra.mxu0 0.0
    %701 = vmatprep.subr.mxu0 0.0
    %702 = vmatpush2.msra.mxu0 0.0
    %703 = vmatprep.subr.mxu0 0.0
    %704 = vmatpush2.msra.mxu0 0.0
    %705 = vmatprep.subr.mxu0 0.0
    %706 = vmatpush2.msra.mxu0 0.0
    %707 = vmatprep.subr.mxu0 0.0
    %708 = vmatpush2.msra.mxu0 0.0
    %709 = vmatprep.subr.mxu0 0.0
    %710 = vmatpush2.msra.mxu0 0.0
    %711 = vmatprep.subr.mxu0 0.0
    %712 = vmatpush2.msra.mxu0 0.0
    %713 = vmatprep.subr.mxu0 0.0
    %714 = vmatpush2.msra.mxu0 0.0
    %715 = vmatprep.mubr.f32.mxu0 0.0
    %v716 = vand.u32 %v495, 4294901760
    %v717 = vsub.f32 %v495, %v716
    %718 = vmatmul.mubr.f32.gmra.mxu0 %v717
    %v719 = vpop.f32.mrf.mxu0
    %v720 = vadd.f32 %v646, %v719
    %v721 = vpop.f32.mrf.mxu0
    %722 = vdwg.mxu0
    %723 = vmatprep.subr.mxu0 0.0
    %724 = vmatpush1.msra.mxu0 0.0
    %725 = vmatprep.subr.mxu0 0.0
    %726 = vmatpush1.msra.mxu0 0.0
    %727 = vmatprep.subr.mxu0 0.0
    %728 = vmatpush1.msra.mxu0 0.0
    %729 = vmatprep.subr.mxu0 0.0
    %730 = vmatpush1.msra.mxu0 0.0
    %731 = vmatprep.subr.mxu0 0.0
    %732 = vmatpush1.msra.mxu0 0.0
    %733 = vmatprep.subr.mxu0 0.0
    %734 = vmatpush1.msra.mxu0 0.0
    %735 = vmatprep.subr.mxu0 0.0
    %736 = vmatpush1.msra.mxu0 0.0
    %737 = vmatprep.subr.mxu0 0.0
    %738 = vmatpush1.msra.mxu0 0.0
    %739 = vmatprep.subr.mxu0 0.0
    %740 = vmatpush1.msra.mxu0 0.0
    %741 = vmatprep.subr.mxu0 0.0
    %742 = vmatpush1.msra.mxu0 0.0
    %743 = vmatprep.subr.mxu0 0.0
    %744 = vmatpush1.msra.mxu0 0.0
    %745 = vmatprep.subr.mxu0 0.0
    %746 = vmatpush1.msra.mxu0 0.0
    %747 = vmatprep.subr.mxu0 0.0
    %748 = vmatpush1.msra.mxu0 0.0
    %749 = vmatprep.subr.mxu0 0.0
    %750 = vmatpush1.msra.mxu0 0.0
    %751 = vmatprep.subr.mxu0 0.0
    %752 = vmatpush1.msra.mxu0 0.0
    %753 = vmatprep.subr.mxu0 0.0
    %v754 = vand.u32 %v37, 4294901760
    %755 = vmatpush1.msra.mxu0 %v754
    %756 = vmatprep.subr.mxu0 0.0
    %757 = vmatpush2.msra.mxu0 0.0
    %758 = vmatprep.subr.mxu0 0.0
    %759 = vmatpush2.msra.mxu0 0.0
    %760 = vmatprep.subr.mxu0 0.0
    %761 = vmatpush2.msra.mxu0 0.0
    %762 = vmatprep.subr.mxu0 0.0
    %763 = vmatpush2.msra.mxu0 0.0
    %764 = vmatprep.subr.mxu0 0.0
    %765 = vmatpush2.msra.mxu0 0.0
    %766 = vmatprep.subr.mxu0 0.0
    %767 = vmatpush2.msra.mxu0 0.0
    %768 = vmatprep.subr.mxu0 0.0
    %769 = vmatpush2.msra.mxu0 0.0
    %770 = vmatprep.subr.mxu0 0.0
    %771 = vmatpush2.msra.mxu0 0.0
    %772 = vmatprep.subr.mxu0 0.0
    %773 = vmatpush2.msra.mxu0 0.0
    %774 = vmatprep.subr.mxu0 0.0
    %775 = vmatpush2.msra.mxu0 0.0
    %776 = vmatprep.subr.mxu0 0.0
    %777 = vmatpush2.msra.mxu0 0.0
    %778 = vmatprep.subr.mxu0 0.0
    %779 = vmatpush2.msra.mxu0 0.0
    %780 = vmatprep.subr.mxu0 0.0
    %781 = vmatpush2.msra.mxu0 0.0
    %782 = vmatprep.subr.mxu0 0.0
    %783 = vmatpush2.msra.mxu0 0.0
    %784 = vmatprep.subr.mxu0 0.0
    %785 = vmatpush2.msra.mxu0 0.0
    %786 = vmatprep.subr.mxu0 0.0
    %787 = vmatpush2.msra.mxu0 0.0
    %788 = vmatprep.mubr.f32.mxu0 0.0
    %v789 = vand.u32 %v495, 4294901760
    %v790 = vsub.f32 %v495, %v789
    %v791 = vand.u32 %v790, 4294901760
    %792 = vmatmul.mubr.f32.gmra.mxu0 %v791
    %v793 = vpop.f32.mrf.mxu0
    %v794 = vadd.f32 %v720, %v793
    %v795 = vpop.f32.mrf.mxu0
    %796 = vdwg.mxu0
    %797 = vmatprep.subr.mxu0 0.0
    %798 = vmatpush1.msra.mxu0 0.0
    %799 = vmatprep.subr.mxu0 0.0
    %800 = vmatpush1.msra.mxu0 0.0
    %801 = vmatprep.subr.mxu0 0.0
    %802 = vmatpush1.msra.mxu0 0.0
    %803 = vmatprep.subr.mxu0 0.0
    %804 = vmatpush1.msra.mxu0 0.0
    %805 = vmatprep.subr.mxu0 0.0
    %806 = vmatpush1.msra.mxu0 0.0
    %807 = vmatprep.subr.mxu0 0.0
    %808 = vmatpush1.msra.mxu0 0.0
    %809 = vmatprep.subr.mxu0 0.0
    %810 = vmatpush1.msra.mxu0 0.0
    %811 = vmatprep.subr.mxu0 0.0
    %812 = vmatpush1.msra.mxu0 0.0
    %813 = vmatprep.subr.mxu0 0.0
    %814 = vmatpush1.msra.mxu0 0.0
    %815 = vmatprep.subr.mxu0 0.0
    %816 = vmatpush1.msra.mxu0 0.0
    %817 = vmatprep.subr.mxu0 0.0
    %818 = vmatpush1.msra.mxu0 0.0
    %819 = vmatprep.subr.mxu0 0.0
    %820 = vmatpush1.msra.mxu0 0.0
    %821 = vmatprep.subr.mxu0 0.0
    %822 = vmatpush1.msra.mxu0 0.0
    %823 = vmatprep.subr.mxu0 0.0
    %824 = vmatpush1.msra.mxu0 0.0
    %825 = vmatprep.subr.mxu0 0.0
    %826 = vmatpush1.msra.mxu0 0.0
    %827 = vmatprep.subr.mxu0 0.0
    %v828 = vand.u32 %v37, 4294901760
    %v829 = vsub.f32 %v37, %v828
    %v830 = vand.u32 %v829, 4294901760
    %831 = vmatpush1.msra.mxu0 %v830
    %832 = vmatprep.subr.mxu0 0.0
    %833 = vmatpush2.msra.mxu0 0.0
    %834 = vmatprep.subr.mxu0 0.0
    %835 = vmatpush2.msra.mxu0 0.0
    %836 = vmatprep.subr.mxu0 0.0
    %837 = vmatpush2.msra.mxu0 0.0
    %838 = vmatprep.subr.mxu0 0.0
    %839 = vmatpush2.msra.mxu0 0.0
    %840 = vmatprep.subr.mxu0 0.0
    %841 = vmatpush2.msra.mxu0 0.0
    %842 = vmatprep.subr.mxu0 0.0
    %843 = vmatpush2.msra.mxu0 0.0
    %844 = vmatprep.subr.mxu0 0.0
    %845 = vmatpush2.msra.mxu0 0.0
    %846 = vmatprep.subr.mxu0 0.0
    %847 = vmatpush2.msra.mxu0 0.0
    %848 = vmatprep.subr.mxu0 0.0
    %849 = vmatpush2.msra.mxu0 0.0
    %850 = vmatprep.subr.mxu0 0.0
    %851 = vmatpush2.msra.mxu0 0.0
    %852 = vmatprep.subr.mxu0 0.0
    %853 = vmatpush2.msra.mxu0 0.0
    %854 = vmatprep.subr.mxu0 0.0
    %855 = vmatpush2.msra.mxu0 0.0
    %856 = vmatprep.subr.mxu0 0.0
    %857 = vmatpush2.msra.mxu0 0.0
    %858 = vmatprep.subr.mxu0 0.0
    %859 = vmatpush2.msra.mxu0 0.0
    %860 = vmatprep.subr.mxu0 0.0
    %861 = vmatpush2.msra.mxu0 0.0
    %862 = vmatprep.subr.mxu0 0.0
    %863 = vmatpush2.msra.mxu0 0.0
    %864 = vmatprep.mubr.f32.mxu0 0.0
    %v865 = vand.u32 %v495, 4294901760
    %866 = vmatmul.mubr.f32.gmra.mxu0 %v865
    %v867 = vpop.f32.mrf.mxu0
    %v868 = vadd.f32 %v794, %v867
    %v869 = vpop.f32.mrf.mxu0
    %870 = vdwg.mxu0
    %871 = vmatprep.subr.mxu0 0.0
    %872 = vmatpush1.msra.mxu0 0.0
    %873 = vmatprep.subr.mxu0 0.0
    %874 = vmatpush1.msra.mxu0 0.0
    %875 = vmatprep.subr.mxu0 0.0
    %876 = vmatpush1.msra.mxu0 0.0
    %877 = vmatprep.subr.mxu0 0.0
    %878 = vmatpush1.msra.mxu0 0.0
    %879 = vmatprep.subr.mxu0 0.0
    %880 = vmatpush1.msra.mxu0 0.0
    %881 = vmatprep.subr.mxu0 0.0
    %882 = vmatpush1.msra.mxu0 0.0
    %883 = vmatprep.subr.mxu0 0.0
    %884 = vmatpush1.msra.mxu0 0.0
    %885 = vmatprep.subr.mxu0 0.0
    %886 = vmatpush1.msra.mxu0 0.0
    %887 = vmatprep.subr.mxu0 0.0
    %888 = vmatpush1.msra.mxu0 0.0
    %889 = vmatprep.subr.mxu0 0.0
    %890 = vmatpush1.msra.mxu0 0.0
    %891 = vmatprep.subr.mxu0 0.0
    %892 = vmatpush1.msra.mxu0 0.0
    %893 = vmatprep.subr.mxu0 0.0
    %894 = vmatpush1.msra.mxu0 0.0
    %895 = vmatprep.subr.mxu0 0.0
    %896 = vmatpush1.msra.mxu0 0.0
    %897 = vmatprep.subr.mxu0 0.0
    %898 = vmatpush1.msra.mxu0 0.0
    %899 = vmatprep.subr.mxu0 0.0
    %900 = vmatpush1.msra.mxu0 0.0
    %901 = vmatprep.subr.mxu0 0.0
    %v902 = vand.u32 %v37, 4294901760
    %903 = vmatpush1.msra.mxu0 %v902
    %904 = vmatprep.subr.mxu0 0.0
    %905 = vmatpush2.msra.mxu0 0.0
    %906 = vmatprep.subr.mxu0 0.0
    %907 = vmatpush2.msra.mxu0 0.0
    %908 = vmatprep.subr.mxu0 0.0
    %909 = vmatpush2.msra.mxu0 0.0
    %910 = vmatprep.subr.mxu0 0.0
    %911 = vmatpush2.msra.mxu0 0.0
    %912 = vmatprep.subr.mxu0 0.0
    %913 = vmatpush2.msra.mxu0 0.0
    %914 = vmatprep.subr.mxu0 0.0
    %915 = vmatpush2.msra.mxu0 0.0
    %916 = vmatprep.subr.mxu0 0.0
    %917 = vmatpush2.msra.mxu0 0.0
    %918 = vmatprep.subr.mxu0 0.0
    %919 = vmatpush2.msra.mxu0 0.0
    %920 = vmatprep.subr.mxu0 0.0
    %921 = vmatpush2.msra.mxu0 0.0
    %922 = vmatprep.subr.mxu0 0.0
    %923 = vmatpush2.msra.mxu0 0.0
    %924 = vmatprep.subr.mxu0 0.0
    %925 = vmatpush2.msra.mxu0 0.0
    %926 = vmatprep.subr.mxu0 0.0
    %927 = vmatpush2.msra.mxu0 0.0
    %928 = vmatprep.subr.mxu0 0.0
    %929 = vmatpush2.msra.mxu0 0.0
    %930 = vmatprep.subr.mxu0 0.0
    %931 = vmatpush2.msra.mxu0 0.0
    %932 = vmatprep.subr.mxu0 0.0
    %933 = vmatpush2.msra.mxu0 0.0
    %934 = vmatprep.subr.mxu0 0.0
    %935 = vmatpush2.msra.mxu0 0.0
    %936 = vmatprep.mubr.f32.mxu0 0.0
    %v937 = vand.u32 %v495, 4294901760
    %938 = vmatmul.mubr.f32.gmra.mxu0 %v937
    %v939 = vpop.f32.mrf.mxu0
    %v940 = vadd.f32 %v868, %v939
    %v941 = vpop.f32.mrf.mxu0
    %942 = vdwg.mxu0
    %v943 = vlaneseq
    %v944 = vshrl.u32 %v943, 7
    %v945 = vsub.s32 0, %v944
    %v946 = vrot.slane %v940, %v945
    %v947 = vsub.f32 %v36, %v946
    %v948 = vmul.f32 %v947, %v947
    %v949 = vsel %vm38, %v948, 0.0
    %v950 = vrot.slane %v949, 4
    %v951 = vadd.f32 %v949, %v950
    %v952 = vrot.slane %v951, 2
    %v953 = vadd.f32 %v951, %v952
    %v954 = vrot.slane %v953, 1
    %v955 = vadd.f32 %v953, %v954
    %956 = vmatprep.subr.mxu0 0.0
    %957 = vmatpush1.xpose.msra.mxu0 0.0
    %958 = vmatprep.subr.mxu0 0.0
    %959 = vmatpush1.xpose.msra.mxu0 0.0
    %960 = vmatprep.subr.mxu0 0.0
    %961 = vmatpush1.xpose.msra.mxu0 0.0
    %962 = vmatprep.subr.mxu0 0.0
    %963 = vmatpush1.xpose.msra.mxu0 0.0
    %964 = vmatprep.subr.mxu0 0.0
    %965 = vmatpush1.xpose.msra.mxu0 0.0
    %966 = vmatprep.subr.mxu0 0.0
    %967 = vmatpush1.xpose.msra.mxu0 0.0
    %968 = vmatprep.subr.mxu0 0.0
    %969 = vmatpush1.xpose.msra.mxu0 0.0
    %970 = vmatprep.subr.mxu0 0.0
    %971 = vmatpush1.xpose.msra.mxu0 0.0
    %972 = vmatprep.subr.mxu0 0.0
    %973 = vmatpush1.xpose.msra.mxu0 0.0
    %974 = vmatprep.subr.mxu0 0.0
    %975 = vmatpush1.xpose.msra.mxu0 0.0
    %976 = vmatprep.subr.mxu0 0.0
    %977 = vmatpush1.xpose.msra.mxu0 0.0
    %978 = vmatprep.subr.mxu0 0.0
    %979 = vmatpush1.xpose.msra.mxu0 0.0
    %980 = vmatprep.subr.mxu0 0.0
    %981 = vmatpush1.xpose.msra.mxu0 0.0
    %982 = vmatprep.subr.mxu0 0.0
    %983 = vmatpush1.xpose.msra.mxu0 0.0
    %984 = vmatprep.subr.mxu0 0.0
    %985 = vmatpush1.xpose.msra.mxu0 0.0
    %986 = vmatprep.subr.mxu0 0.0
    %v987 = vand.u32 %v37, 4294901760
    %988 = vmatpush1.xpose.msra.mxu0 %v987
    %989 = vmatprep.subr.mxu0 0.0
    %990 = vmatpush2.xpose.msra.mxu0 0.0
    %991 = vmatprep.subr.mxu0 0.0
    %992 = vmatpush2.xpose.msra.mxu0 0.0
    %993 = vmatprep.subr.mxu0 0.0
    %994 = vmatpush2.xpose.msra.mxu0 0.0
    %995 = vmatprep.subr.mxu0 0.0
    %996 = vmatpush2.xpose.msra.mxu0 0.0
    %997 = vmatprep.subr.mxu0 0.0
    %998 = vmatpush2.xpose.msra.mxu0 0.0
    %999 = vmatprep.subr.mxu0 0.0
    %1000 = vmatpush2.xpose.msra.mxu0 0.0
    %1001 = vmatprep.subr.mxu0 0.0
    %1002 = vmatpush2.xpose.msra.mxu0 0.0
    %1003 = vmatprep.subr.mxu0 0.0
    %1004 = vmatpush2.xpose.msra.mxu0 0.0
    %1005 = vmatprep.subr.mxu0 0.0
    %1006 = vmatpush2.xpose.msra.mxu0 0.0
    %1007 = vmatprep.subr.mxu0 0.0
    %1008 = vmatpush2.xpose.msra.mxu0 0.0
    %1009 = vmatprep.subr.mxu0 0.0
    %1010 = vmatpush2.xpose.msra.mxu0 0.0
    %1011 = vmatprep.subr.mxu0 0.0
    %1012 = vmatpush2.xpose.msra.mxu0 0.0
    %1013 = vmatprep.subr.mxu0 0.0
    %1014 = vmatpush2.xpose.msra.mxu0 0.0
    %1015 = vmatprep.subr.mxu0 0.0
    %1016 = vmatpush2.xpose.msra.mxu0 0.0
    %1017 = vmatprep.subr.mxu0 0.0
    %1018 = vmatpush2.xpose.msra.mxu0 0.0
    %1019 = vmatprep.subr.mxu0 0.0
    %1020 = vmatpush2.xpose.msra.mxu0 0.0
    %1021 = vmatprep.mubr.f32.mxu0 0.0
    %v1022 = vand.u32 %v955, 4294901760
    %v1023 = vsub.f32 %v955, %v1022
    %v1024 = vand.u32 %v1023, 4294901760
    %v1025 = vsub.f32 %v1023, %v1024
    %v1026 = vand.u32 %v1025, 4294901760
    %1027 = vmatmul.mubr.f32.gmra.mxu0 %v1026
    %v1028 = vpop.f32.mrf.mxu0
    %v1029 = vadd.f32 0.0, %v1028
    %v1030 = vpop.f32.mrf.mxu0
    %1031 = vdwg.mxu0
    %1032 = vmatprep.subr.mxu0 0.0
    %1033 = vmatpush1.xpose.msra.mxu0 0.0
    %1034 = vmatprep.subr.mxu0 0.0
    %1035 = vmatpush1.xpose.msra.mxu0 0.0
    %1036 = vmatprep.subr.mxu0 0.0
    %1037 = vmatpush1.xpose.msra.mxu0 0.0
    %1038 = vmatprep.subr.mxu0 0.0
    %1039 = vmatpush1.xpose.msra.mxu0 0.0
    %1040 = vmatprep.subr.mxu0 0.0
    %1041 = vmatpush1.xpose.msra.mxu0 0.0
    %1042 = vmatprep.subr.mxu0 0.0
    %1043 = vmatpush1.xpose.msra.mxu0 0.0
    %1044 = vmatprep.subr.mxu0 0.0
    %1045 = vmatpush1.xpose.msra.mxu0 0.0
    %1046 = vmatprep.subr.mxu0 0.0
    %1047 = vmatpush1.xpose.msra.mxu0 0.0
    %1048 = vmatprep.subr.mxu0 0.0
    %1049 = vmatpush1.xpose.msra.mxu0 0.0
    %1050 = vmatprep.subr.mxu0 0.0
    %1051 = vmatpush1.xpose.msra.mxu0 0.0
    %1052 = vmatprep.subr.mxu0 0.0
    %1053 = vmatpush1.xpose.msra.mxu0 0.0
    %1054 = vmatprep.subr.mxu0 0.0
    %1055 = vmatpush1.xpose.msra.mxu0 0.0
    %1056 = vmatprep.subr.mxu0 0.0
    %1057 = vmatpush1.xpose.msra.mxu0 0.0
    %1058 = vmatprep.subr.mxu0 0.0
    %1059 = vmatpush1.xpose.msra.mxu0 0.0
    %1060 = vmatprep.subr.mxu0 0.0
    %1061 = vmatpush1.xpose.msra.mxu0 0.0
    %1062 = vmatprep.subr.mxu0 0.0
    %v1063 = vand.u32 %v37, 4294901760
    %v1064 = vsub.f32 %v37, %v1063
    %v1065 = vand.u32 %v1064, 4294901760
    %v1066 = vsub.f32 %v1064, %v1065
    %v1067 = vand.u32 %v1066, 4294901760
    %1068 = vmatpush1.xpose.msra.mxu0 %v1067
    %1069 = vmatprep.subr.mxu0 0.0
    %1070 = vmatpush2.xpose.msra.mxu0 0.0
    %1071 = vmatprep.subr.mxu0 0.0
    %1072 = vmatpush2.xpose.msra.mxu0 0.0
    %1073 = vmatprep.subr.mxu0 0.0
    %1074 = vmatpush2.xpose.msra.mxu0 0.0
    %1075 = vmatprep.subr.mxu0 0.0
    %1076 = vmatpush2.xpose.msra.mxu0 0.0
    %1077 = vmatprep.subr.mxu0 0.0
    %1078 = vmatpush2.xpose.msra.mxu0 0.0
    %1079 = vmatprep.subr.mxu0 0.0
    %1080 = vmatpush2.xpose.msra.mxu0 0.0
    %1081 = vmatprep.subr.mxu0 0.0
    %1082 = vmatpush2.xpose.msra.mxu0 0.0
    %1083 = vmatprep.subr.mxu0 0.0
    %1084 = vmatpush2.xpose.msra.mxu0 0.0
    %1085 = vmatprep.subr.mxu0 0.0
    %1086 = vmatpush2.xpose.msra.mxu0 0.0
    %1087 = vmatprep.subr.mxu0 0.0
    %1088 = vmatpush2.xpose.msra.mxu0 0.0
    %1089 = vmatprep.subr.mxu0 0.0
    %1090 = vmatpush2.xpose.msra.mxu0 0.0
    %1091 = vmatprep.subr.mxu0 0.0
    %1092 = vmatpush2.xpose.msra.mxu0 0.0
    %1093 = vmatprep.subr.mxu0 0.0
    %1094 = vmatpush2.xpose.msra.mxu0 0.0
    %1095 = vmatprep.subr.mxu0 0.0
    %1096 = vmatpush2.xpose.msra.mxu0 0.0
    %1097 = vmatprep.subr.mxu0 0.0
    %1098 = vmatpush2.xpose.msra.mxu0 0.0
    %1099 = vmatprep.subr.mxu0 0.0
    %1100 = vmatpush2.xpose.msra.mxu0 0.0
    %1101 = vmatprep.mubr.f32.mxu0 0.0
    %v1102 = vand.u32 %v955, 4294901760
    %1103 = vmatmul.mubr.f32.gmra.mxu0 %v1102
    %v1104 = vpop.f32.mrf.mxu0
    %v1105 = vadd.f32 %v1029, %v1104
    %v1106 = vpop.f32.mrf.mxu0
    %1107 = vdwg.mxu0
    %1108 = vmatprep.subr.mxu0 0.0
    %1109 = vmatpush1.xpose.msra.mxu0 0.0
    %1110 = vmatprep.subr.mxu0 0.0
    %1111 = vmatpush1.xpose.msra.mxu0 0.0
    %1112 = vmatprep.subr.mxu0 0.0
    %1113 = vmatpush1.xpose.msra.mxu0 0.0
    %1114 = vmatprep.subr.mxu0 0.0
    %1115 = vmatpush1.xpose.msra.mxu0 0.0
    %1116 = vmatprep.subr.mxu0 0.0
    %1117 = vmatpush1.xpose.msra.mxu0 0.0
    %1118 = vmatprep.subr.mxu0 0.0
    %1119 = vmatpush1.xpose.msra.mxu0 0.0
    %1120 = vmatprep.subr.mxu0 0.0
    %1121 = vmatpush1.xpose.msra.mxu0 0.0
    %1122 = vmatprep.subr.mxu0 0.0
    %1123 = vmatpush1.xpose.msra.mxu0 0.0
    %1124 = vmatprep.subr.mxu0 0.0
    %1125 = vmatpush1.xpose.msra.mxu0 0.0
    %1126 = vmatprep.subr.mxu0 0.0
    %1127 = vmatpush1.xpose.msra.mxu0 0.0
    %1128 = vmatprep.subr.mxu0 0.0
    %1129 = vmatpush1.xpose.msra.mxu0 0.0
    %1130 = vmatprep.subr.mxu0 0.0
    %1131 = vmatpush1.xpose.msra.mxu0 0.0
    %1132 = vmatprep.subr.mxu0 0.0
    %1133 = vmatpush1.xpose.msra.mxu0 0.0
    %1134 = vmatprep.subr.mxu0 0.0
    %1135 = vmatpush1.xpose.msra.mxu0 0.0
    %1136 = vmatprep.subr.mxu0 0.0
    %1137 = vmatpush1.xpose.msra.mxu0 0.0
    %1138 = vmatprep.subr.mxu0 0.0
    %v1139 = vand.u32 %v37, 4294901760
    %v1140 = vsub.f32 %v37, %v1139
    %1141 = vmatpush1.xpose.msra.mxu0 %v1140
    %1142 = vmatprep.subr.mxu0 0.0
    %1143 = vmatpush2.xpose.msra.mxu0 0.0
    %1144 = vmatprep.subr.mxu0 0.0
    %1145 = vmatpush2.xpose.msra.mxu0 0.0
    %1146 = vmatprep.subr.mxu0 0.0
    %1147 = vmatpush2.xpose.msra.mxu0 0.0
    %1148 = vmatprep.subr.mxu0 0.0
    %1149 = vmatpush2.xpose.msra.mxu0 0.0
    %1150 = vmatprep.subr.mxu0 0.0
    %1151 = vmatpush2.xpose.msra.mxu0 0.0
    %1152 = vmatprep.subr.mxu0 0.0
    %1153 = vmatpush2.xpose.msra.mxu0 0.0
    %1154 = vmatprep.subr.mxu0 0.0
    %1155 = vmatpush2.xpose.msra.mxu0 0.0
    %1156 = vmatprep.subr.mxu0 0.0
    %1157 = vmatpush2.xpose.msra.mxu0 0.0
    %1158 = vmatprep.subr.mxu0 0.0
    %1159 = vmatpush2.xpose.msra.mxu0 0.0
    %1160 = vmatprep.subr.mxu0 0.0
    %1161 = vmatpush2.xpose.msra.mxu0 0.0
    %1162 = vmatprep.subr.mxu0 0.0
    %1163 = vmatpush2.xpose.msra.mxu0 0.0
    %1164 = vmatprep.subr.mxu0 0.0
    %1165 = vmatpush2.xpose.msra.mxu0 0.0
    %1166 = vmatprep.subr.mxu0 0.0
    %1167 = vmatpush2.xpose.msra.mxu0 0.0
    %1168 = vmatprep.subr.mxu0 0.0
    %1169 = vmatpush2.xpose.msra.mxu0 0.0
    %1170 = vmatprep.subr.mxu0 0.0
    %1171 = vmatpush2.xpose.msra.mxu0 0.0
    %1172 = vmatprep.subr.mxu0 0.0
    %1173 = vmatpush2.xpose.msra.mxu0 0.0
    %1174 = vmatprep.mubr.f32.mxu0 0.0
    %v1175 = vand.u32 %v955, 4294901760
    %v1176 = vsub.f32 %v955, %v1175
    %1177 = vmatmul.mubr.f32.gmra.mxu0 %v1176
    %v1178 = vpop.f32.mrf.mxu0
    %v1179 = vadd.f32 %v1105, %v1178
    %v1180 = vpop.f32.mrf.mxu0
    %1181 = vdwg.mxu0
    %1182 = vmatprep.subr.mxu0 0.0
    %1183 = vmatpush1.xpose.msra.mxu0 0.0
    %1184 = vmatprep.subr.mxu0 0.0
    %1185 = vmatpush1.xpose.msra.mxu0 0.0
    %1186 = vmatprep.subr.mxu0 0.0
    %1187 = vmatpush1.xpose.msra.mxu0 0.0
    %1188 = vmatprep.subr.mxu0 0.0
    %1189 = vmatpush1.xpose.msra.mxu0 0.0
    %1190 = vmatprep.subr.mxu0 0.0
    %1191 = vmatpush1.xpose.msra.mxu0 0.0
    %1192 = vmatprep.subr.mxu0 0.0
    %1193 = vmatpush1.xpose.msra.mxu0 0.0
    %1194 = vmatprep.subr.mxu0 0.0
    %1195 = vmatpush1.xpose.msra.mxu0 0.0
    %1196 = vmatprep.subr.mxu0 0.0
    %1197 = vmatpush1.xpose.msra.mxu0 0.0
    %1198 = vmatprep.subr.mxu0 0.0
    %1199 = vmatpush1.xpose.msra.mxu0 0.0
    %1200 = vmatprep.subr.mxu0 0.0
    %1201 = vmatpush1.xpose.msra.mxu0 0.0
    %1202 = vmatprep.subr.mxu0 0.0
    %1203 = vmatpush1.xpose.msra.mxu0 0.0
    %1204 = vmatprep.subr.mxu0 0.0
    %1205 = vmatpush1.xpose.msra.mxu0 0.0
    %1206 = vmatprep.subr.mxu0 0.0
    %1207 = vmatpush1.xpose.msra.mxu0 0.0
    %1208 = vmatprep.subr.mxu0 0.0
    %1209 = vmatpush1.xpose.msra.mxu0 0.0
    %1210 = vmatprep.subr.mxu0 0.0
    %1211 = vmatpush1.xpose.msra.mxu0 0.0
    %1212 = vmatprep.subr.mxu0 0.0
    %v1213 = vand.u32 %v37, 4294901760
    %1214 = vmatpush1.xpose.msra.mxu0 %v1213
    %1215 = vmatprep.subr.mxu0 0.0
    %1216 = vmatpush2.xpose.msra.mxu0 0.0
    %1217 = vmatprep.subr.mxu0 0.0
    %1218 = vmatpush2.xpose.msra.mxu0 0.0
    %1219 = vmatprep.subr.mxu0 0.0
    %1220 = vmatpush2.xpose.msra.mxu0 0.0
    %1221 = vmatprep.subr.mxu0 0.0
    %1222 = vmatpush2.xpose.msra.mxu0 0.0
    %1223 = vmatprep.subr.mxu0 0.0
    %1224 = vmatpush2.xpose.msra.mxu0 0.0
    %1225 = vmatprep.subr.mxu0 0.0
    %1226 = vmatpush2.xpose.msra.mxu0 0.0
    %1227 = vmatprep.subr.mxu0 0.0
    %1228 = vmatpush2.xpose.msra.mxu0 0.0
    %1229 = vmatprep.subr.mxu0 0.0
    %1230 = vmatpush2.xpose.msra.mxu0 0.0
    %1231 = vmatprep.subr.mxu0 0.0
    %1232 = vmatpush2.xpose.msra.mxu0 0.0
    %1233 = vmatprep.subr.mxu0 0.0
    %1234 = vmatpush2.xpose.msra.mxu0 0.0
    %1235 = vmatprep.subr.mxu0 0.0
    %1236 = vmatpush2.xpose.msra.mxu0 0.0
    %1237 = vmatprep.subr.mxu0 0.0
    %1238 = vmatpush2.xpose.msra.mxu0 0.0
    %1239 = vmatprep.subr.mxu0 0.0
    %1240 = vmatpush2.xpose.msra.mxu0 0.0
    %1241 = vmatprep.subr.mxu0 0.0
    %1242 = vmatpush2.xpose.msra.mxu0 0.0
    %1243 = vmatprep.subr.mxu0 0.0
    %1244 = vmatpush2.xpose.msra.mxu0 0.0
    %1245 = vmatprep.subr.mxu0 0.0
    %1246 = vmatpush2.xpose.msra.mxu0 0.0
    %1247 = vmatprep.mubr.f32.mxu0 0.0
    %v1248 = vand.u32 %v955, 4294901760
    %v1249 = vsub.f32 %v955, %v1248
    %v1250 = vand.u32 %v1249, 4294901760
    %1251 = vmatmul.mubr.f32.gmra.mxu0 %v1250
    %v1252 = vpop.f32.mrf.mxu0
    %v1253 = vadd.f32 %v1179, %v1252
    %v1254 = vpop.f32.mrf.mxu0
    %1255 = vdwg.mxu0
    %1256 = vmatprep.subr.mxu0 0.0
    %1257 = vmatpush1.xpose.msra.mxu0 0.0
    %1258 = vmatprep.subr.mxu0 0.0
    %1259 = vmatpush1.xpose.msra.mxu0 0.0
    %1260 = vmatprep.subr.mxu0 0.0
    %1261 = vmatpush1.xpose.msra.mxu0 0.0
    %1262 = vmatprep.subr.mxu0 0.0
    %1263 = vmatpush1.xpose.msra.mxu0 0.0
    %1264 = vmatprep.subr.mxu0 0.0
    %1265 = vmatpush1.xpose.msra.mxu0 0.0
    %1266 = vmatprep.subr.mxu0 0.0
    %1267 = vmatpush1.xpose.msra.mxu0 0.0
    %1268 = vmatprep.subr.mxu0 0.0
    %1269 = vmatpush1.xpose.msra.mxu0 0.0
    %1270 = vmatprep.subr.mxu0 0.0
    %1271 = vmatpush1.xpose.msra.mxu0 0.0
    %1272 = vmatprep.subr.mxu0 0.0
    %1273 = vmatpush1.xpose.msra.mxu0 0.0
    %1274 = vmatprep.subr.mxu0 0.0
    %1275 = vmatpush1.xpose.msra.mxu0 0.0
    %1276 = vmatprep.subr.mxu0 0.0
    %1277 = vmatpush1.xpose.msra.mxu0 0.0
    %1278 = vmatprep.subr.mxu0 0.0
    %1279 = vmatpush1.xpose.msra.mxu0 0.0
    %1280 = vmatprep.subr.mxu0 0.0
    %1281 = vmatpush1.xpose.msra.mxu0 0.0
    %1282 = vmatprep.subr.mxu0 0.0
    %1283 = vmatpush1.xpose.msra.mxu0 0.0
    %1284 = vmatprep.subr.mxu0 0.0
    %1285 = vmatpush1.xpose.msra.mxu0 0.0
    %1286 = vmatprep.subr.mxu0 0.0
    %v1287 = vand.u32 %v37, 4294901760
    %v1288 = vsub.f32 %v37, %v1287
    %v1289 = vand.u32 %v1288, 4294901760
    %1290 = vmatpush1.xpose.msra.mxu0 %v1289
    %1291 = vmatprep.subr.mxu0 0.0
    %1292 = vmatpush2.xpose.msra.mxu0 0.0
    %1293 = vmatprep.subr.mxu0 0.0
    %1294 = vmatpush2.xpose.msra.mxu0 0.0
    %1295 = vmatprep.subr.mxu0 0.0
    %1296 = vmatpush2.xpose.msra.mxu0 0.0
    %1297 = vmatprep.subr.mxu0 0.0
    %1298 = vmatpush2.xpose.msra.mxu0 0.0
    %1299 = vmatprep.subr.mxu0 0.0
    %1300 = vmatpush2.xpose.msra.mxu0 0.0
    %1301 = vmatprep.subr.mxu0 0.0
    %1302 = vmatpush2.xpose.msra.mxu0 0.0
    %1303 = vmatprep.subr.mxu0 0.0
    %1304 = vmatpush2.xpose.msra.mxu0 0.0
    %1305 = vmatprep.subr.mxu0 0.0
    %1306 = vmatpush2.xpose.msra.mxu0 0.0
    %1307 = vmatprep.subr.mxu0 0.0
    %1308 = vmatpush2.xpose.msra.mxu0 0.0
    %1309 = vmatprep.subr.mxu0 0.0
    %1310 = vmatpush2.xpose.msra.mxu0 0.0
    %1311 = vmatprep.subr.mxu0 0.0
    %1312 = vmatpush2.xpose.msra.mxu0 0.0
    %1313 = vmatprep.subr.mxu0 0.0
    %1314 = vmatpush2.xpose.msra.mxu0 0.0
    %1315 = vmatprep.subr.mxu0 0.0
    %1316 = vmatpush2.xpose.msra.mxu0 0.0
    %1317 = vmatprep.subr.mxu0 0.0
    %1318 = vmatpush2.xpose.msra.mxu0 0.0
    %1319 = vmatprep.subr.mxu0 0.0
    %1320 = vmatpush2.xpose.msra.mxu0 0.0
    %1321 = vmatprep.subr.mxu0 0.0
    %1322 = vmatpush2.xpose.msra.mxu0 0.0
    %1323 = vmatprep.mubr.f32.mxu0 0.0
    %v1324 = vand.u32 %v955, 4294901760
    %1325 = vmatmul.mubr.f32.gmra.mxu0 %v1324
    %v1326 = vpop.f32.mrf.mxu0
    %v1327 = vadd.f32 %v1253, %v1326
    %v1328 = vpop.f32.mrf.mxu0
    %1329 = vdwg.mxu0
    %1330 = vmatprep.subr.mxu0 0.0
    %1331 = vmatpush1.xpose.msra.mxu0 0.0
    %1332 = vmatprep.subr.mxu0 0.0
    %1333 = vmatpush1.xpose.msra.mxu0 0.0
    %1334 = vmatprep.subr.mxu0 0.0
    %1335 = vmatpush1.xpose.msra.mxu0 0.0
    %1336 = vmatprep.subr.mxu0 0.0
    %1337 = vmatpush1.xpose.msra.mxu0 0.0
    %1338 = vmatprep.subr.mxu0 0.0
    %1339 = vmatpush1.xpose.msra.mxu0 0.0
    %1340 = vmatprep.subr.mxu0 0.0
    %1341 = vmatpush1.xpose.msra.mxu0 0.0
    %1342 = vmatprep.subr.mxu0 0.0
    %1343 = vmatpush1.xpose.msra.mxu0 0.0
    %1344 = vmatprep.subr.mxu0 0.0
    %1345 = vmatpush1.xpose.msra.mxu0 0.0
    %1346 = vmatprep.subr.mxu0 0.0
    %1347 = vmatpush1.xpose.msra.mxu0 0.0
    %1348 = vmatprep.subr.mxu0 0.0
    %1349 = vmatpush1.xpose.msra.mxu0 0.0
    %1350 = vmatprep.subr.mxu0 0.0
    %1351 = vmatpush1.xpose.msra.mxu0 0.0
    %1352 = vmatprep.subr.mxu0 0.0
    %1353 = vmatpush1.xpose.msra.mxu0 0.0
    %1354 = vmatprep.subr.mxu0 0.0
    %1355 = vmatpush1.xpose.msra.mxu0 0.0
    %1356 = vmatprep.subr.mxu0 0.0
    %1357 = vmatpush1.xpose.msra.mxu0 0.0
    %1358 = vmatprep.subr.mxu0 0.0
    %1359 = vmatpush1.xpose.msra.mxu0 0.0
    %1360 = vmatprep.subr.mxu0 0.0
    %v1361 = vand.u32 %v37, 4294901760
    %1362 = vmatpush1.xpose.msra.mxu0 %v1361
    %1363 = vmatprep.subr.mxu0 0.0
    %1364 = vmatpush2.xpose.msra.mxu0 0.0
    %1365 = vmatprep.subr.mxu0 0.0
    %1366 = vmatpush2.xpose.msra.mxu0 0.0
    %1367 = vmatprep.subr.mxu0 0.0
    %1368 = vmatpush2.xpose.msra.mxu0 0.0
    %1369 = vmatprep.subr.mxu0 0.0
    %1370 = vmatpush2.xpose.msra.mxu0 0.0
    %1371 = vmatprep.subr.mxu0 0.0
    %1372 = vmatpush2.xpose.msra.mxu0 0.0
    %1373 = vmatprep.subr.mxu0 0.0
    %1374 = vmatpush2.xpose.msra.mxu0 0.0
    %1375 = vmatprep.subr.mxu0 0.0
    %1376 = vmatpush2.xpose.msra.mxu0 0.0
    %1377 = vmatprep.subr.mxu0 0.0
    %1378 = vmatpush2.xpose.msra.mxu0 0.0
    %1379 = vmatprep.subr.mxu0 0.0
    %1380 = vmatpush2.xpose.msra.mxu0 0.0
    %1381 = vmatprep.subr.mxu0 0.0
    %1382 = vmatpush2.xpose.msra.mxu0 0.0
    %1383 = vmatprep.subr.mxu0 0.0
    %1384 = vmatpush2.xpose.msra.mxu0 0.0
    %1385 = vmatprep.subr.mxu0 0.0
    %1386 = vmatpush2.xpose.msra.mxu0 0.0
    %1387 = vmatprep.subr.mxu0 0.0
    %1388 = vmatpush2.xpose.msra.mxu0 0.0
    %1389 = vmatprep.subr.mxu0 0.0
    %1390 = vmatpush2.xpose.msra.mxu0 0.0
    %1391 = vmatprep.subr.mxu0 0.0
    %1392 = vmatpush2.xpose.msra.mxu0 0.0
    %1393 = vmatprep.subr.mxu0 0.0
    %1394 = vmatpush2.xpose.msra.mxu0 0.0
    %1395 = vmatprep.mubr.f32.mxu0 0.0
    %v1396 = vand.u32 %v955, 4294901760
    %1397 = vmatmul.mubr.f32.gmra.mxu0 %v1396
    %v1398 = vpop.f32.mrf.mxu0
    %v1399 = vadd.f32 %v1327, %v1398
    %v1400 = vpop.f32.mrf.mxu0
    %1401 = vdwg.mxu0
    %v1402 = vmul.f32 %v1399, 0.015625
    %v1403 = vadd.f32 %v1402, 1e-05
    %v1404 = vrsqrt.pop %v1403
    %v1406 = vsel %vm493, %v1404, 0
    %1408 = vmatprep.subr.mxu0 0.0
    %1409 = vmatpush1.msra.mxu0 0.0
    %1410 = vmatprep.subr.mxu0 0.0
    %1411 = vmatpush1.msra.mxu0 0.0
    %1412 = vmatprep.subr.mxu0 0.0
    %1413 = vmatpush1.msra.mxu0 0.0
    %1414 = vmatprep.subr.mxu0 0.0
    %1415 = vmatpush1.msra.mxu0 0.0
    %1416 = vmatprep.subr.mxu0 0.0
    %1417 = vmatpush1.msra.mxu0 0.0
    %1418 = vmatprep.subr.mxu0 0.0
    %1419 = vmatpush1.msra.mxu0 0.0
    %1420 = vmatprep.subr.mxu0 0.0
    %1421 = vmatpush1.msra.mxu0 0.0
    %1422 = vmatprep.subr.mxu0 0.0
    %1423 = vmatpush1.msra.mxu0 0.0
    %1424 = vmatprep.subr.mxu0 0.0
    %1425 = vmatpush1.msra.mxu0 0.0
    %1426 = vmatprep.subr.mxu0 0.0
    %1427 = vmatpush1.msra.mxu0 0.0
    %1428 = vmatprep.subr.mxu0 0.0
    %1429 = vmatpush1.msra.mxu0 0.0
    %1430 = vmatprep.subr.mxu0 0.0
    %1431 = vmatpush1.msra.mxu0 0.0
    %1432 = vmatprep.subr.mxu0 0.0
    %1433 = vmatpush1.msra.mxu0 0.0
    %1434 = vmatprep.subr.mxu0 0.0
    %1435 = vmatpush1.msra.mxu0 0.0
    %1436 = vmatprep.subr.mxu0 0.0
    %1437 = vmatpush1.msra.mxu0 0.0
    %1438 = vmatprep.subr.mxu0 0.0
    %v1439 = vand.u32 %v37, 4294901760
    %1440 = vmatpush1.msra.mxu0 %v1439
    %1441 = vmatprep.subr.mxu0 0.0
    %1442 = vmatpush2.msra.mxu0 0.0
    %1443 = vmatprep.subr.mxu0 0.0
    %1444 = vmatpush2.msra.mxu0 0.0
    %1445 = vmatprep.subr.mxu0 0.0
    %1446 = vmatpush2.msra.mxu0 0.0
    %1447 = vmatprep.subr.mxu0 0.0
    %1448 = vmatpush2.msra.mxu0 0.0
    %1449 = vmatprep.subr.mxu0 0.0
    %1450 = vmatpush2.msra.mxu0 0.0
    %1451 = vmatprep.subr.mxu0 0.0
    %1452 = vmatpush2.msra.mxu0 0.0
    %1453 = vmatprep.subr.mxu0 0.0
    %1454 = vmatpush2.msra.mxu0 0.0
    %1455 = vmatprep.subr.mxu0 0.0
    %1456 = vmatpush2.msra.mxu0 0.0
    %1457 = vmatprep.subr.mxu0 0.0
    %1458 = vmatpush2.msra.mxu0 0.0
    %1459 = vmatprep.subr.mxu0 0.0
    %1460 = vmatpush2.msra.mxu0 0.0
    %1461 = vmatprep.subr.mxu0 0.0
    %1462 = vmatpush2.msra.mxu0 0.0
    %1463 = vmatprep.subr.mxu0 0.0
    %1464 = vmatpush2.msra.mxu0 0.0
    %1465 = vmatprep.subr.mxu0 0.0
    %1466 = vmatpush2.msra.mxu0 0.0
    %1467 = vmatprep.subr.mxu0 0.0
    %1468 = vmatpush2.msra.mxu0 0.0
    %1469 = vmatprep.subr.mxu0 0.0
    %1470 = vmatpush2.msra.mxu0 0.0
    %1471 = vmatprep.subr.mxu0 0.0
    %1472 = vmatpush2.msra.mxu0 0.0
    %1473 = vmatprep.mubr.f32.mxu0 0.0
    %v1474 = vand.u32 %v1406, 4294901760
    %v1475 = vsub.f32 %v1406, %v1474
    %v1476 = vand.u32 %v1475, 4294901760
    %v1477 = vsub.f32 %v1475, %v1476
    %v1478 = vand.u32 %v1477, 4294901760
    %1479 = vmatmul.mubr.f32.gmra.mxu0 %v1478
    %v1480 = vpop.f32.mrf.mxu0
    %v1481 = vadd.f32 0.0, %v1480
    %v1482 = vpop.f32.mrf.mxu0
    %1483 = vdwg.mxu0
    %1484 = vmatprep.subr.mxu0 0.0
    %1485 = vmatpush1.msra.mxu0 0.0
    %1486 = vmatprep.subr.mxu0 0.0
    %1487 = vmatpush1.msra.mxu0 0.0
    %1488 = vmatprep.subr.mxu0 0.0
    %1489 = vmatpush1.msra.mxu0 0.0
    %1490 = vmatprep.subr.mxu0 0.0
    %1491 = vmatpush1.msra.mxu0 0.0
    %1492 = vmatprep.subr.mxu0 0.0
    %1493 = vmatpush1.msra.mxu0 0.0
    %1494 = vmatprep.subr.mxu0 0.0
    %1495 = vmatpush1.msra.mxu0 0.0
    %1496 = vmatprep.subr.mxu0 0.0
    %1497 = vmatpush1.msra.mxu0 0.0
    %1498 = vmatprep.subr.mxu0 0.0
    %1499 = vmatpush1.msra.mxu0 0.0
    %1500 = vmatprep.subr.mxu0 0.0
    %1501 = vmatpush1.msra.mxu0 0.0
    %1502 = vmatprep.subr.mxu0 0.0
    %1503 = vmatpush1.msra.mxu0 0.0
    %1504 = vmatprep.subr.mxu0 0.0
    %1505 = vmatpush1.msra.mxu0 0.0
    %1506 = vmatprep.subr.mxu0 0.0
    %1507 = vmatpush1.msra.mxu0 0.0
    %1508 = vmatprep.subr.mxu0 0.0
    %1509 = vmatpush1.msra.mxu0 0.0
    %1510 = vmatprep.subr.mxu0 0.0
    %1511 = vmatpush1.msra.mxu0 0.0
    %1512 = vmatprep.subr.mxu0 0.0
    %1513 = vmatpush1.msra.mxu0 0.0
    %1514 = vmatprep.subr.mxu0 0.0
    %v1515 = vand.u32 %v37, 4294901760
    %v1516 = vsub.f32 %v37, %v1515
    %v1517 = vand.u32 %v1516, 4294901760
    %v1518 = vsub.f32 %v1516, %v1517
    %v1519 = vand.u32 %v1518, 4294901760
    %1520 = vmatpush1.msra.mxu0 %v1519
    %1521 = vmatprep.subr.mxu0 0.0
    %1522 = vmatpush2.msra.mxu0 0.0
    %1523 = vmatprep.subr.mxu0 0.0
    %1524 = vmatpush2.msra.mxu0 0.0
    %1525 = vmatprep.subr.mxu0 0.0
    %1526 = vmatpush2.msra.mxu0 0.0
    %1527 = vmatprep.subr.mxu0 0.0
    %1528 = vmatpush2.msra.mxu0 0.0
    %1529 = vmatprep.subr.mxu0 0.0
    %1530 = vmatpush2.msra.mxu0 0.0
    %1531 = vmatprep.subr.mxu0 0.0
    %1532 = vmatpush2.msra.mxu0 0.0
    %1533 = vmatprep.subr.mxu0 0.0
    %1534 = vmatpush2.msra.mxu0 0.0
    %1535 = vmatprep.subr.mxu0 0.0
    %1536 = vmatpush2.msra.mxu0 0.0
    %1537 = vmatprep.subr.mxu0 0.0
    %1538 = vmatpush2.msra.mxu0 0.0
    %1539 = vmatprep.subr.mxu0 0.0
    %1540 = vmatpush2.msra.mxu0 0.0
    %1541 = vmatprep.subr.mxu0 0.0
    %1542 = vmatpush2.msra.mxu0 0.0
    %1543 = vmatprep.subr.mxu0 0.0
    %1544 = vmatpush2.msra.mxu0 0.0
    %1545 = vmatprep.subr.mxu0 0.0
    %1546 = vmatpush2.msra.mxu0 0.0
    %1547 = vmatprep.subr.mxu0 0.0
    %1548 = vmatpush2.msra.mxu0 0.0
    %1549 = vmatprep.subr.mxu0 0.0
    %1550 = vmatpush2.msra.mxu0 0.0
    %1551 = vmatprep.subr.mxu0 0.0
    %1552 = vmatpush2.msra.mxu0 0.0
    %1553 = vmatprep.mubr.f32.mxu0 0.0
    %v1554 = vand.u32 %v1406, 4294901760
    %1555 = vmatmul.mubr.f32.gmra.mxu0 %v1554
    %v1556 = vpop.f32.mrf.mxu0
    %v1557 = vadd.f32 %v1481, %v1556
    %v1558 = vpop.f32.mrf.mxu0
    %1559 = vdwg.mxu0
    %1560 = vmatprep.subr.mxu0 0.0
    %1561 = vmatpush1.msra.mxu0 0.0
    %1562 = vmatprep.subr.mxu0 0.0
    %1563 = vmatpush1.msra.mxu0 0.0
    %1564 = vmatprep.subr.mxu0 0.0
    %1565 = vmatpush1.msra.mxu0 0.0
    %1566 = vmatprep.subr.mxu0 0.0
    %1567 = vmatpush1.msra.mxu0 0.0
    %1568 = vmatprep.subr.mxu0 0.0
    %1569 = vmatpush1.msra.mxu0 0.0
    %1570 = vmatprep.subr.mxu0 0.0
    %1571 = vmatpush1.msra.mxu0 0.0
    %1572 = vmatprep.subr.mxu0 0.0
    %1573 = vmatpush1.msra.mxu0 0.0
    %1574 = vmatprep.subr.mxu0 0.0
    %1575 = vmatpush1.msra.mxu0 0.0
    %1576 = vmatprep.subr.mxu0 0.0
    %1577 = vmatpush1.msra.mxu0 0.0
    %1578 = vmatprep.subr.mxu0 0.0
    %1579 = vmatpush1.msra.mxu0 0.0
    %1580 = vmatprep.subr.mxu0 0.0
    %1581 = vmatpush1.msra.mxu0 0.0
    %1582 = vmatprep.subr.mxu0 0.0
    %1583 = vmatpush1.msra.mxu0 0.0
    %1584 = vmatprep.subr.mxu0 0.0
    %1585 = vmatpush1.msra.mxu0 0.0
    %1586 = vmatprep.subr.mxu0 0.0
    %1587 = vmatpush1.msra.mxu0 0.0
    %1588 = vmatprep.subr.mxu0 0.0
    %1589 = vmatpush1.msra.mxu0 0.0
    %1590 = vmatprep.subr.mxu0 0.0
    %v1591 = vand.u32 %v37, 4294901760
    %v1592 = vsub.f32 %v37, %v1591
    %1593 = vmatpush1.msra.mxu0 %v1592
    %1594 = vmatprep.subr.mxu0 0.0
    %1595 = vmatpush2.msra.mxu0 0.0
    %1596 = vmatprep.subr.mxu0 0.0
    %1597 = vmatpush2.msra.mxu0 0.0
    %1598 = vmatprep.subr.mxu0 0.0
    %1599 = vmatpush2.msra.mxu0 0.0
    %1600 = vmatprep.subr.mxu0 0.0
    %1601 = vmatpush2.msra.mxu0 0.0
    %1602 = vmatprep.subr.mxu0 0.0
    %1603 = vmatpush2.msra.mxu0 0.0
    %1604 = vmatprep.subr.mxu0 0.0
    %1605 = vmatpush2.msra.mxu0 0.0
    %1606 = vmatprep.subr.mxu0 0.0
    %1607 = vmatpush2.msra.mxu0 0.0
    %1608 = vmatprep.subr.mxu0 0.0
    %1609 = vmatpush2.msra.mxu0 0.0
    %1610 = vmatprep.subr.mxu0 0.0
    %1611 = vmatpush2.msra.mxu0 0.0
    %1612 = vmatprep.subr.mxu0 0.0
    %1613 = vmatpush2.msra.mxu0 0.0
    %1614 = vmatprep.subr.mxu0 0.0
    %1615 = vmatpush2.msra.mxu0 0.0
    %1616 = vmatprep.subr.mxu0 0.0
    %1617 = vmatpush2.msra.mxu0 0.0
    %1618 = vmatprep.subr.mxu0 0.0
    %1619 = vmatpush2.msra.mxu0 0.0
    %1620 = vmatprep.subr.mxu0 0.0
    %1621 = vmatpush2.msra.mxu0 0.0
    %1622 = vmatprep.subr.mxu0 0.0
    %1623 = vmatpush2.msra.mxu0 0.0
    %1624 = vmatprep.subr.mxu0 0.0
    %1625 = vmatpush2.msra.mxu0 0.0
    %1626 = vmatprep.mubr.f32.mxu0 0.0
    %v1627 = vand.u32 %v1406, 4294901760
    %v1628 = vsub.f32 %v1406, %v1627
    %1629 = vmatmul.mubr.f32.gmra.mxu0 %v1628
    %v1630 = vpop.f32.mrf.mxu0
    %v1631 = vadd.f32 %v1557, %v1630
    %v1632 = vpop.f32.mrf.mxu0
    %1633 = vdwg.mxu0
    %1634 = vmatprep.subr.mxu0 0.0
    %1635 = vmatpush1.msra.mxu0 0.0
    %1636 = vmatprep.subr.mxu0 0.0
    %1637 = vmatpush1.msra.mxu0 0.0
    %1638 = vmatprep.subr.mxu0 0.0
    %1639 = vmatpush1.msra.mxu0 0.0
    %1640 = vmatprep.subr.mxu0 0.0
    %1641 = vmatpush1.msra.mxu0 0.0
    %1642 = vmatprep.subr.mxu0 0.0
    %1643 = vmatpush1.msra.mxu0 0.0
    %1644 = vmatprep.subr.mxu0 0.0
    %1645 = vmatpush1.msra.mxu0 0.0
    %1646 = vmatprep.subr.mxu0 0.0
    %1647 = vmatpush1.msra.mxu0 0.0
    %1648 = vmatprep.subr.mxu0 0.0
    %1649 = vmatpush1.msra.mxu0 0.0
    %1650 = vmatprep.subr.mxu0 0.0
    %1651 = vmatpush1.msra.mxu0 0.0
    %1652 = vmatprep.subr.mxu0 0.0
    %1653 = vmatpush1.msra.mxu0 0.0
    %1654 = vmatprep.subr.mxu0 0.0
    %1655 = vmatpush1.msra.mxu0 0.0
    %1656 = vmatprep.subr.mxu0 0.0
    %1657 = vmatpush1.msra.mxu0 0.0
    %1658 = vmatprep.subr.mxu0 0.0
    %1659 = vmatpush1.msra.mxu0 0.0
    %1660 = vmatprep.subr.mxu0 0.0
    %1661 = vmatpush1.msra.mxu0 0.0
    %1662 = vmatprep.subr.mxu0 0.0
    %1663 = vmatpush1.msra.mxu0 0.0
    %1664 = vmatprep.subr.mxu0 0.0
    %v1665 = vand.u32 %v37, 4294901760
    %1666 = vmatpush1.msra.mxu0 %v1665
    %1667 = vmatprep.subr.mxu0 0.0
    %1668 = vmatpush2.msra.mxu0 0.0
    %1669 = vmatprep.subr.mxu0 0.0
    %1670 = vmatpush2.msra.mxu0 0.0
    %1671 = vmatprep.subr.mxu0 0.0
    %1672 = vmatpush2.msra.mxu0 0.0
    %1673 = vmatprep.subr.mxu0 0.0
    %1674 = vmatpush2.msra.mxu0 0.0
    %1675 = vmatprep.subr.mxu0 0.0
    %1676 = vmatpush2.msra.mxu0 0.0
    %1677 = vmatprep.subr.mxu0 0.0
    %1678 = vmatpush2.msra.mxu0 0.0
    %1679 = vmatprep.subr.mxu0 0.0
    %1680 = vmatpush2.msra.mxu0 0.0
    %1681 = vmatprep.subr.mxu0 0.0
    %1682 = vmatpush2.msra.mxu0 0.0
    %1683 = vmatprep.subr.mxu0 0.0
    %1684 = vmatpush2.msra.mxu0 0.0
    %1685 = vmatprep.subr.mxu0 0.0
    %1686 = vmatpush2.msra.mxu0 0.0
    %1687 = vmatprep.subr.mxu0 0.0
    %1688 = vmatpush2.msra.mxu0 0.0
    %1689 = vmatprep.subr.mxu0 0.0
    %1690 = vmatpush2.msra.mxu0 0.0
    %1691 = vmatprep.subr.mxu0 0.0
    %1692 = vmatpush2.msra.mxu0 0.0
    %1693 = vmatprep.subr.mxu0 0.0
    %1694 = vmatpush2.msra.mxu0 0.0
    %1695 = vmatprep.subr.mxu0 0.0
    %1696 = vmatpush2.msra.mxu0 0.0
    %1697 = vmatprep.subr.mxu0 0.0
    %1698 = vmatpush2.msra.mxu0 0.0
    %1699 = vmatprep.mubr.f32.mxu0 0.0
    %v1700 = vand.u32 %v1406, 4294901760
    %v1701 = vsub.f32 %v1406, %v1700
    %v1702 = vand.u32 %v1701, 4294901760
    %1703 = vmatmul.mubr.f32.gmra.mxu0 %v1702
    %v1704 = vpop.f32.mrf.mxu0
    %v1705 = vadd.f32 %v1631, %v1704
    %v1706 = vpop.f32.mrf.mxu0
    %1707 = vdwg.mxu0
    %1708 = vmatprep.subr.mxu0 0.0
    %1709 = vmatpush1.msra.mxu0 0.0
    %1710 = vmatprep.subr.mxu0 0.0
    %1711 = vmatpush1.msra.mxu0 0.0
    %1712 = vmatprep.subr.mxu0 0.0
    %1713 = vmatpush1.msra.mxu0 0.0
    %1714 = vmatprep.subr.mxu0 0.0
    %1715 = vmatpush1.msra.mxu0 0.0
    %1716 = vmatprep.subr.mxu0 0.0
    %1717 = vmatpush1.msra.mxu0 0.0
    %1718 = vmatprep.subr.mxu0 0.0
    %1719 = vmatpush1.msra.mxu0 0.0
    %1720 = vmatprep.subr.mxu0 0.0
    %1721 = vmatpush1.msra.mxu0 0.0
    %1722 = vmatprep.subr.mxu0 0.0
    %1723 = vmatpush1.msra.mxu0 0.0
    %1724 = vmatprep.subr.mxu0 0.0
    %1725 = vmatpush1.msra.mxu0 0.0
    %1726 = vmatprep.subr.mxu0 0.0
    %1727 = vmatpush1.msra.mxu0 0.0
    %1728 = vmatprep.subr.mxu0 0.0
    %1729 = vmatpush1.msra.mxu0 0.0
    %1730 = vmatprep.subr.mxu0 0.0
    %1731 = vmatpush1.msra.mxu0 0.0
    %1732 = vmatprep.subr.mxu0 0.0
    %1733 = vmatpush1.msra.mxu0 0.0
    %1734 = vmatprep.subr.mxu0 0.0
    %1735 = vmatpush1.msra.mxu0 0.0
    %1736 = vmatprep.subr.mxu0 0.0
    %1737 = vmatpush1.msra.mxu0 0.0
    %1738 = vmatprep.subr.mxu0 0.0
    %v1739 = vand.u32 %v37, 4294901760
    %v1740 = vsub.f32 %v37, %v1739
    %v1741 = vand.u32 %v1740, 4294901760
    %1742 = vmatpush1.msra.mxu0 %v1741
    %1743 = vmatprep.subr.mxu0 0.0
    %1744 = vmatpush2.msra.mxu0 0.0
    %1745 = vmatprep.subr.mxu0 0.0
    %1746 = vmatpush2.msra.mxu0 0.0
    %1747 = vmatprep.subr.mxu0 0.0
    %1748 = vmatpush2.msra.mxu0 0.0
    %1749 = vmatprep.subr.mxu0 0.0
    %1750 = vmatpush2.msra.mxu0 0.0
    %1751 = vmatprep.subr.mxu0 0.0
    %1752 = vmatpush2.msra.mxu0 0.0
    %1753 = vmatprep.subr.mxu0 0.0
    %1754 = vmatpush2.msra.mxu0 0.0
    %1755 = vmatprep.subr.mxu0 0.0
    %1756 = vmatpush2.msra.mxu0 0.0
    %1757 = vmatprep.subr.mxu0 0.0
    %1758 = vmatpush2.msra.mxu0 0.0
    %1759 = vmatprep.subr.mxu0 0.0
    %1760 = vmatpush2.msra.mxu0 0.0
    %1761 = vmatprep.subr.mxu0 0.0
    %1762 = vmatpush2.msra.mxu0 0.0
    %1763 = vmatprep.subr.mxu0 0.0
    %1764 = vmatpush2.msra.mxu0 0.0
    %1765 = vmatprep.subr.mxu0 0.0
    %1766 = vmatpush2.msra.mxu0 0.0
    %1767 = vmatprep.subr.mxu0 0.0
    %1768 = vmatpush2.msra.mxu0 0.0
    %1769 = vmatprep.subr.mxu0 0.0
    %1770 = vmatpush2.msra.mxu0 0.0
    %1771 = vmatprep.subr.mxu0 0.0
    %1772 = vmatpush2.msra.mxu0 0.0
    %1773 = vmatprep.subr.mxu0 0.0
    %1774 = vmatpush2.msra.mxu0 0.0
    %1775 = vmatprep.mubr.f32.mxu0 0.0
    %v1776 = vand.u32 %v1406, 4294901760
    %1777 = vmatmul.mubr.f32.gmra.mxu0 %v1776
    %v1778 = vpop.f32.mrf.mxu0
    %v1779 = vadd.f32 %v1705, %v1778
    %v1780 = vpop.f32.mrf.mxu0
    %1781 = vdwg.mxu0
    %1782 = vmatprep.subr.mxu0 0.0
    %1783 = vmatpush1.msra.mxu0 0.0
    %1784 = vmatprep.subr.mxu0 0.0
    %1785 = vmatpush1.msra.mxu0 0.0
    %1786 = vmatprep.subr.mxu0 0.0
    %1787 = vmatpush1.msra.mxu0 0.0
    %1788 = vmatprep.subr.mxu0 0.0
    %1789 = vmatpush1.msra.mxu0 0.0
    %1790 = vmatprep.subr.mxu0 0.0
    %1791 = vmatpush1.msra.mxu0 0.0
    %1792 = vmatprep.subr.mxu0 0.0
    %1793 = vmatpush1.msra.mxu0 0.0
    %1794 = vmatprep.subr.mxu0 0.0
    %1795 = vmatpush1.msra.mxu0 0.0
    %1796 = vmatprep.subr.mxu0 0.0
    %1797 = vmatpush1.msra.mxu0 0.0
    %1798 = vmatprep.subr.mxu0 0.0
    %1799 = vmatpush1.msra.mxu0 0.0
    %1800 = vmatprep.subr.mxu0 0.0
    %1801 = vmatpush1.msra.mxu0 0.0
    %1802 = vmatprep.subr.mxu0 0.0
    %1803 = vmatpush1.msra.mxu0 0.0
    %1804 = vmatprep.subr.mxu0 0.0
    %1805 = vmatpush1.msra.mxu0 0.0
    %1806 = vmatprep.subr.mxu0 0.0
    %1807 = vmatpush1.msra.mxu0 0.0
    %1808 = vmatprep.subr.mxu0 0.0
    %1809 = vmatpush1.msra.mxu0 0.0
    %1810 = vmatprep.subr.mxu0 0.0
    %1811 = vmatpush1.msra.mxu0 0.0
    %1812 = vmatprep.subr.mxu0 0.0
    %v1813 = vand.u32 %v37, 4294901760
    %1814 = vmatpush1.msra.mxu0 %v1813
    %1815 = vmatprep.subr.mxu0 0.0
    %1816 = vmatpush2.msra.mxu0 0.0
    %1817 = vmatprep.subr.mxu0 0.0
    %1818 = vmatpush2.msra.mxu0 0.0
    %1819 = vmatprep.subr.mxu0 0.0
    %1820 = vmatpush2.msra.mxu0 0.0
    %1821 = vmatprep.subr.mxu0 0.0
    %1822 = vmatpush2.msra.mxu0 0.0
    %1823 = vmatprep.subr.mxu0 0.0
    %1824 = vmatpush2.msra.mxu0 0.0
    %1825 = vmatprep.subr.mxu0 0.0
    %1826 = vmatpush2.msra.mxu0 0.0
    %1827 = vmatprep.subr.mxu0 0.0
    %1828 = vmatpush2.msra.mxu0 0.0
    %1829 = vmatprep.subr.mxu0 0.0
    %1830 = vmatpush2.msra.mxu0 0.0
    %1831 = vmatprep.subr.mxu0 0.0
    %1832 = vmatpush2.msra.mxu0 0.0
    %1833 = vmatprep.subr.mxu0 0.0
    %1834 = vmatpush2.msra.mxu0 0.0
    %1835 = vmatprep.subr.mxu0 0.0
    %1836 = vmatpush2.msra.mxu0 0.0
    %1837 = vmatprep.subr.mxu0 0.0
    %1838 = vmatpush2.msra.mxu0 0.0
    %1839 = vmatprep.subr.mxu0 0.0
    %1840 = vmatpush2.msra.mxu0 0.0
    %1841 = vmatprep.subr.mxu0 0.0
    %1842 = vmatpush2.msra.mxu0 0.0
    %1843 = vmatprep.subr.mxu0 0.0
    %1844 = vmatpush2.msra.mxu0 0.0
    %1845 = vmatprep.subr.mxu0 0.0
    %1846 = vmatpush2.msra.mxu0 0.0
    %1847 = vmatprep.mubr.f32.mxu0 0.0
    %v1848 = vand.u32 %v1406, 4294901760
    %1849 = vmatmul.mubr.f32.gmra.mxu0 %v1848
    %v1850 = vpop.f32.mrf.mxu0
    %v1851 = vadd.f32 %v1779, %v1850
    %v1852 = vpop.f32.mrf.mxu0
    %1853 = vdwg.mxu0
    %v1854 = vlaneseq
    %v1855 = vshrl.u32 %v1854, 7
    %v1856 = vsub.s32 0, %v1855
    %v1857 = vrot.slane %v1851, %v1856
    %v1858 = vmul.f32 %v947, %v1857
    %1859 = vst [vmem:[#allocation7] sm:$0xf] %v1858
    // Predicated region
    $region18: #{tpu_custom_call.1} parent=1 // pred_check
      _
    $region19: #{tpu_custom_call.1} parent=1 // pred_check_branch
      %1861 = sbr.rel (0) target = $region21
    $region20: #{tpu_custom_call.1} parent=1 // pred_region
      %s1863 = ssub.s32 64, 64
      %1864 = vsyncadd [#allocation4], %s1863
      %s1866 = sshll.u32 [#allocation7], 4
      %s1867 = int_to_ptr.vmem [resolvable:$true] %s1866
      %1869 = dma.vmem_to_hbm [thread:$0]  %s1867, 64, %s2, [#allocation4]
    $region21: #{tpu_custom_call.1} parent=1 // pred_fallthru
      _
    // Predicated region
    $region22: #{tpu_custom_call.1} parent=1 // pred_check
      _
    $region23: #{tpu_custom_call.1} parent=1 // pred_check_branch
      %1871 = sbr.rel (0) target = $region25
    $region24: #{tpu_custom_call.1} parent=1 // pred_region
      %1872 = dma.done [#allocation4], 64
    $region25: #{tpu_custom_call.1} parent=1 // pred_fallthru
      _
    %1873 = vsyncpa [#allocation3], 1
    %1874 = vsyncpa [#allocation6], 1
    %1875 = vsyncpa [#allocation4], 1

</llo_original>
